<compile_context>
chip_gen: v6e
topology: v6e:2x2x1
jax: 0.10.0
libtpu: 0.0.40
codegen_flags: <defaults>
</compile_context>

<pallas_src>
import functools
import math

import jax
import jax.numpy as jnp
from jax.experimental import pallas as pl
from jax.experimental.pallas import tpu as pltpu


def _dense_block_kernel(*refs, num_layers, concat_input, W):
    """Fused DenseBlock for one image, channels-first (C, H*W) layout.

    refs = [x_ref,
            scale_0, shift_0, w_0, ..., scale_{L-1}, shift_{L-1}, w_{L-1},
            o_ref,
            feat_scratch, col_scratch]

    x_ref:   (1, C_in, P)  input image, P = H*W                       (f32)
    scale_l: (C_l, 1)      folded BN scale = gamma / sqrt(var + eps)  (f32)
    shift_l: (C_l, 1)      folded BN shift = beta - mean * scale      (f32)
    w_l:     (G, 9*C_l)    conv weights, column = (kh*3+kw)*C_l + c   (bf16)
    o_ref:   (1, C_out, P) concatenated block output                  (f32)
    feat_scratch: (C_in + L*G, P) bf16   growing feature buffer
    col_scratch:  (9*C_max, P)    bf16   im2col buffer (reused per layer)
    """
    x_ref = refs[0]
    layer_refs = refs[1:1 + 3 * num_layers]
    o_ref = refs[1 + 3 * num_layers]
    feat_ref, col_ref = refs[2 + 3 * num_layers:]

    _, c_in, P = x_ref.shape
    growth = layer_refs[2].shape[0]

    # Stage this image's input channels into the bf16 feature scratch
    # (single lane-dense store).
    feat_ref[:c_in, :] = x_ref[0].astype(feat_ref.dtype)

    out_off = 0
    if concat_input:
        o_ref[0, :c_in, :] = x_ref[0]
        out_off = c_in

    # Per-lane (= per flattened pixel) column index, used to zero the
    # horizontally shifted taps at the left/right image border.
    wcol = jax.lax.broadcasted_iota(jnp.int32, (1, P), 1) % W
    valid_if_dw_neg = wcol >= 1           # dest w >= 1    (dw == -1)
    valid_if_dw_pos = wcol <= W - 2       # dest w <= W-2  (dw == +1)

    c_l = c_in  # input channel count of the current layer
    for l in range(num_layers):
        scale_ref, shift_ref, w_ref = layer_refs[3 * l:3 * l + 3]

        # BatchNorm (eval mode, folded scale/shift) + ReLU in f32, then one
        # cast to bf16 so all nine tap stores are half width.
        a = jnp.maximum(
            feat_ref[:c_l, :].astype(jnp.float32) * scale_ref[...]
            + shift_ref[...], 0.0).astype(col_ref.dtype)

        # im2col with offset-destination stores:
        #   col[(kh*3+kw)*c_l + c, p] = a[c, p + (kh-1)*W + (kw-1)]  (0 outside)
        # NOTE: every row < 9*c_l of col_ref is fully rewritten each layer
        # (value range + end fills cover all P lanes), so stale data from a
        # previous, wider layer is never read.  Rows >= 9*c_l are never read.
        for kh in range(3):
            for kw in range(3):
                dh, dw = kh - 1, kw - 1
                s = dh * W + dw
                rows = slice((kh * 3 + kw) * c_l, (kh * 3 + kw + 1) * c_l)
                d0, d1 = max(0, -s), P - max(0, s)       # valid dest lanes
                val = a[:, d0 + s:d1 + s]
                if dw < 0:
                    val = jnp.where(valid_if_dw_neg[:, d0:d1], val, 0)
                elif dw > 0:
                    val = jnp.where(valid_if_dw_pos[:, d0:d1], val, 0)
                col_ref[rows, d0:d1] = val
                if d0 > 0:
                    col_ref[rows, :d0] = jnp.zeros((c_l, d0), col_ref.dtype)
                if d1 < P:
                    col_ref[rows, d1:] = jnp.zeros((c_l, P - d1),
                                                   col_ref.dtype)

        # Single lane-dense MXU matmul: (G, 9*C_l) @ (9*C_l, P), f32 acc.
        y = jnp.dot(w_ref[...], col_ref[:9 * c_l, :],
                    preferred_element_type=jnp.float32)

        # Append to the growing feature buffer and write this layer's slice
        # of the block output directly (no final realignment copy).
        feat_ref[c_l:c_l + growth, :] = y.astype(feat_ref.dtype)
        o_ref[0, out_off + l * growth:out_off + (l + 1) * growth, :] = (
            y.astype(o_ref.dtype))
        c_l += growth


def dense_block_pallas(x_nchw, params, concat_input=False):
    """DenseBlock forward. Input/output NCHW (PyTorch convention)."""
    N, c_in, H, W = x_nchw.shape
    P = H * W
    num_layers = len(params)
    growth = params[0]["w_flat"].shape[0]
    c_total = c_in + num_layers * growth
    c_out = c_total if concat_input else num_layers * growth
    c_max = c_in + (num_layers - 1) * growth        # widest layer input

    # NCHW -> (N, C, H*W): a pure reshape (no transpose); channels-first
    # matches PyTorch memory order and makes H*W the lane dimension.
    x = x_nchw.reshape(N, c_in, P)

    inputs = [x]
    in_specs = [pl.BlockSpec((1, c_in, P), lambda n: (n, 0, 0))]
    param_map = lambda n: (0, 0)                    # grid-invariant params
    for p in params:
        c_l = p["scale"].shape[0]
        inputs += [p["scale"], p["shift"], p["w_flat"]]
        in_specs += [pl.BlockSpec((c_l, 1), param_map),
                     pl.BlockSpec((c_l, 1), param_map),
                     pl.BlockSpec((growth, 9 * c_l), param_map)]

    # VMEM budget: scratches + double-buffered in/out/param blocks + slack,
    # capped by (most of) the device's physical VMEM.
    nbytes = lambda shape, dt: math.prod(shape) * jnp.dtype(dt).itemsize
    scratch_bytes = (nbytes((c_total, P), jnp.bfloat16)
                     + nbytes((9 * c_max, P), jnp.bfloat16))
    block_bytes = (nbytes((1, c_in, P), x.dtype)
                   + nbytes((1, c_out, P), x.dtype)
                   + sum(2 * nbytes(p["scale"].shape, p["scale"].dtype)
                         + nbytes(p["w_flat"].shape, p["w_flat"].dtype)
                         for p in params))
    needed = scratch_bytes + 2 * block_bytes + (4 << 20)
    try:
        vmem_cap = int(pltpu.get_tpu_info().vmem_capacity_bytes)
    except Exception:
        vmem_cap = 64 << 20                         # conservative (v7x per-TC)
    vmem_limit = min(max(needed, 32 << 20), 100 << 20, int(0.9 * vmem_cap))

    flops = int(sum(2 * N * P * 9 * (c_in + l * growth) * growth
                    for l in range(num_layers)))
    bytes_accessed = int(
        x.size * x.dtype.itemsize + N * c_out * P * 4
        + sum(p["w_flat"].size * 2 + 2 * p["scale"].size * 4 for p in params))

    out = pl.pallas_call(
        functools.partial(_dense_block_kernel, num_layers=num_layers,
                          concat_input=concat_input, W=W),
        out_shape=jax.ShapeDtypeStruct((N, c_out, P), x.dtype),
        grid=(N,),
        in_specs=in_specs,
        out_specs=pl.BlockSpec((1, c_out, P), lambda n: (n, 0, 0)),
        scratch_shapes=[
            pltpu.VMEM((c_total, P), jnp.bfloat16),      # growing features
            pltpu.VMEM((9 * c_max, P), jnp.bfloat16),    # im2col buffer
        ],
        compiler_params=pltpu.CompilerParams(
            dimension_semantics=("parallel",),           # both v7x TCs busy
            vmem_limit_bytes=vmem_limit),
        cost_estimate=pl.CostEstimate(flops=flops, transcendentals=0,
                                      bytes_accessed=bytes_accessed),
    )(*inputs)

    return out.reshape(N, c_out, H, W)


def make_dense_block_params(key, in_channels, growth_rate, num_layers,
                            eps=1e-5):
    """Deterministic parameters for every DenseLayer in the block."""
    params = []
    for l in range(num_layers):
        c_in = in_channels + l * growth_rate
        key, k_w, k_g, k_b, k_m, k_v = jax.random.split(key, 6)
        # PyTorch conv weight layout: (out_ch, in_ch, 3, 3)
        w_oihw = 0.1 * jax.random.normal(k_w, (growth_rate, c_in, 3, 3),
                                         jnp.float32)
        gamma = 0.5 + jax.random.uniform(k_g, (c_in,), jnp.float32)
        beta = 0.1 * jax.random.normal(k_b, (c_in,), jnp.float32)
        r_mean = 0.1 * jax.random.normal(k_m, (c_in,), jnp.float32)
        r_var = 0.5 + jax.random.uniform(k_v, (c_in,), jnp.float32)

        scale = gamma / jnp.sqrt(r_var + eps)
        shift = beta - r_mean * scale
        # (out, in, kh, kw) -> (out, kh, kw, in) -> (G, 9*in); column index =
        # (kh*3+kw)*c_in + c, matching the kernel's im2col row order.
        w_flat = jnp.transpose(w_oihw, (0, 2, 3, 1)).reshape(
            growth_rate, 9 * c_in).astype(jnp.bfloat16)
        params.append(dict(scale=scale[:, None], shift=shift[:, None],
                           w_flat=w_flat, w_oihw=w_oihw))
    return params


# ----------------------- pure-JAX reference (for check) ---------------------
def dense_block_ref(x_nchw, params, concat_input=False):
    outs = [x_nchw] if concat_input else []
    # Mimic the kernel's numerics: bf16 growing feature buffer, f32 BN/ReLU,
    # bf16 conv inputs, f32 accumulation.
    layer_in = x_nchw.astype(jnp.bfloat16).astype(jnp.float32)
    for p in params:
        c_l = p["scale"].shape[0]
        a = jnp.maximum(layer_in * p["scale"].reshape(1, c_l, 1, 1)
                        + p["shift"].reshape(1, c_l, 1, 1), 0.0)
        y = jax.lax.conv_general_dilated(
            a.astype(jnp.bfloat16), p["w_oihw"].astype(jnp.bfloat16),
            window_strides=(1, 1), padding="SAME",
            dimension_numbers=("NCHW", "OIHW", "NCHW"),
            preferred_element_type=jnp.float32)
        outs.append(y)
        layer_in = jnp.concatenate(
            [layer_in, y.astype(jnp.bfloat16).astype(jnp.float32)], axis=1)
    return jnp.concatenate(outs, axis=1)


if __name__ == "__main__":
    # Small shapes consistent with the module: NCHW input.
    N, C_IN, H, W = 2, 4, 16, 16
    GROWTH, NUM_LAYERS = 4, 3
    CONCAT_INPUT = False

    key = jax.random.PRNGKey(0)
    key, k_x = jax.random.split(key)
    x = jax.random.normal(k_x, (N, C_IN, H, W), jnp.float32)

    params = make_dense_block_params(key, C_IN, GROWTH, NUM_LAYERS)

    out = jax.block_until_ready(
        dense_block_pallas(x, params, concat_input=CONCAT_INPUT))

    expected_channels = GROWTH * NUM_LAYERS + (C_IN if CONCAT_INPUT else 0)
    assert out.shape == (N, expected_channels, H, W), out.shape

    ref = jax.block_until_ready(
        dense_block_ref(x, params, concat_input=CONCAT_INPUT))
    # bf16 feature buffer + bf16 MXU inputs with f32 accumulation: small
    # accumulation-order differences vs. the lax.conv reference are expected.
    err = float(jnp.max(jnp.abs(out - ref)))
    assert err < 2e-2, err

    print("KERNEL_OK")
</pallas_src>

<mosaic_0001>
module attributes {stable_mosaic.version = 11 : i64} {
  func.func @_dense_block_kernel(%arg0: i32, %arg1: memref<1x4x256xf32, #tpu.memory_space<vmem>>, %arg2: memref<4x1xf32, #tpu.memory_space<vmem>>, %arg3: memref<4x1xf32, #tpu.memory_space<vmem>>, %arg4: memref<4x36xbf16, #tpu.memory_space<vmem>>, %arg5: memref<8x1xf32, #tpu.memory_space<vmem>>, %arg6: memref<8x1xf32, #tpu.memory_space<vmem>>, %arg7: memref<4x72xbf16, #tpu.memory_space<vmem>>, %arg8: memref<12x1xf32, #tpu.memory_space<vmem>>, %arg9: memref<12x1xf32, #tpu.memory_space<vmem>>, %arg10: memref<4x108xbf16, #tpu.memory_space<vmem>>, %arg11: memref<1x12x256xf32, #tpu.memory_space<vmem>>, %arg12: memref<16x256xbf16, #tpu.memory_space<vmem>>, %arg13: memref<108x256xbf16, #tpu.memory_space<vmem>>) attributes {dimension_semantics = [#tpu.dimension_semantics<parallel>], iteration_bounds = array<i64: 2>, scalar_prefetch = 0 : i64, scratch_operands = 2 : i64, tpu.core_type = #tpu.core_type<tc>, window_params = [{transform_indices = @transform_0, window_bounds = array<i64: 1, 4, 256>}, {pipeline_mode = #tpu.pipeline_mode<synchronous>, transform_indices = @transform_1, window_bounds = array<i64: 4, 1>}, {pipeline_mode = #tpu.pipeline_mode<synchronous>, transform_indices = @transform_2, window_bounds = array<i64: 4, 1>}, {pipeline_mode = #tpu.pipeline_mode<synchronous>, transform_indices = @transform_3, window_bounds = array<i64: 4, 36>}, {pipeline_mode = #tpu.pipeline_mode<synchronous>, transform_indices = @transform_4, window_bounds = array<i64: 8, 1>}, {pipeline_mode = #tpu.pipeline_mode<synchronous>, transform_indices = @transform_5, window_bounds = array<i64: 8, 1>}, {pipeline_mode = #tpu.pipeline_mode<synchronous>, transform_indices = @transform_6, window_bounds = array<i64: 4, 72>}, {pipeline_mode = #tpu.pipeline_mode<synchronous>, transform_indices = @transform_7, window_bounds = array<i64: 12, 1>}, {pipeline_mode = #tpu.pipeline_mode<synchronous>, transform_indices = @transform_8, window_bounds = array<i64: 12, 1>}, {pipeline_mode = #tpu.pipeline_mode<synchronous>, transform_indices = @transform_9, window_bounds = array<i64: 4, 108>}, {transform_indices = @transform_10, window_bounds = array<i64: 1, 12, 256>}]} {
    %c0 = arith.constant 0 : index
    %c0_0 = arith.constant 0 : index
    %c0_1 = arith.constant 0 : index
    %0 = vector.load %arg1[%c0, %c0_0, %c0_1] : memref<1x4x256xf32, #tpu.memory_space<vmem>>, vector<1x4x256xf32>
    %1 = vector.shape_cast %0 : vector<1x4x256xf32> to vector<4x256xf32>
    %2 = arith.truncf %1 : vector<4x256xf32> to vector<4x256xbf16>
    %c0_2 = arith.constant 0 : index
    %c0_3 = arith.constant 0 : index
    %3 = vector.load %arg12[%c0_2, %c0_3] : memref<16x256xbf16, #tpu.memory_space<vmem>>, vector<4x256xbf16>
    tpu.vector_store %arg12[%c0_2, %c0_3], %2 {strides = array<i32>} : memref<16x256xbf16, #tpu.memory_space<vmem>>, vector<4x256xbf16>,
    %4 = tpu.iota {dimensions = array<i32: 1>} : vector<1x256xi32>
    %c16_i32 = arith.constant 16 : i32
    %c0_i32 = arith.constant 0 : i32
    %5 = arith.cmpi eq, %c16_i32, %c0_i32 : i32
    %c1_i32 = arith.constant 1 : i32
    %6 = arith.select %5, %c1_i32, %c16_i32 : i32
    %7 = vector.broadcast %6 : i32 to vector<1x256xi32>
    %8 = arith.remsi %4, %7 : vector<1x256xi32>
    %c0_i32_4 = arith.constant 0 : i32
    %9 = vector.broadcast %c0_i32_4 : i32 to vector<1x256xi32>
    %10 = arith.cmpi ne, %8, %9 : vector<1x256xi32>
    %c0_i32_5 = arith.constant 0 : i32
    %11 = vector.broadcast %c0_i32_5 : i32 to vector<1x256xi32>
    %12 = arith.cmpi slt, %8, %11 : vector<1x256xi32>
    %c0_i32_6 = arith.constant 0 : i32
    %13 = arith.cmpi slt, %6, %c0_i32_6 : i32
    %14 = vector.broadcast %13 : i1 to vector<1x256xi1>
    %15 = vector.broadcast %14 : vector<1x256xi1> to vector<1x256xi1>
    %16 = arith.xori %12, %15 : vector<1x256xi1>
    %17 = arith.andi %16, %10 : vector<1x256xi1>
    %18 = vector.broadcast %6 : i32 to vector<1x256xi32>
    %19 = arith.addi %8, %18 : vector<1x256xi32>
    %20 = arith.select %17, %19, %8 : vector<1x256xi1>, vector<1x256xi32>
    %c1_i32_7 = arith.constant 1 : i32
    %21 = vector.broadcast %c1_i32_7 : i32 to vector<1x256xi32>
    %22 = arith.cmpi sge, %20, %21 : vector<1x256xi32>
    %c14_i32 = arith.constant 14 : i32
    %23 = vector.broadcast %c14_i32 : i32 to vector<1x256xi32>
    %24 = arith.cmpi sle, %20, %23 : vector<1x256xi32>
    %c0_8 = arith.constant 0 : index
    %c0_9 = arith.constant 0 : index
    %25 = vector.load %arg12[%c0_8, %c0_9] : memref<16x256xbf16, #tpu.memory_space<vmem>>, vector<4x256xbf16>
    %26 = arith.extf %25 : vector<4x256xbf16> to vector<4x256xf32>
    %c0_10 = arith.constant 0 : index
    %c0_11 = arith.constant 0 : index
    %27 = vector.load %arg2[%c0_10, %c0_11] : memref<4x1xf32, #tpu.memory_space<vmem>>, vector<4x1xf32>
    %28 = vector.broadcast %27 : vector<4x1xf32> to vector<4x256xf32>
    %29 = arith.mulf %26, %28 : vector<4x256xf32>
    %c0_12 = arith.constant 0 : index
    %c0_13 = arith.constant 0 : index
    %30 = vector.load %arg3[%c0_12, %c0_13] : memref<4x1xf32, #tpu.memory_space<vmem>>, vector<4x1xf32>
    %31 = vector.broadcast %30 : vector<4x1xf32> to vector<4x256xf32>
    %32 = arith.addf %29, %31 : vector<4x256xf32>
    %cst = arith.constant 0.000000e+00 : f32
    %33 = vector.broadcast %cst : f32 to vector<4x256xf32>
    %34 = arith.maximumf %32, %33 : vector<4x256xf32>
    %35 = arith.truncf %34 : vector<4x256xf32> to vector<4x256xbf16>
    %36 = vector.extract_strided_slice %35 {offsets = [0, 0], sizes = [4, 239], strides = [1, 1]} : vector<4x256xbf16> to vector<4x239xbf16>
    %37 = vector.extract_strided_slice %22 {offsets = [0, 17], sizes = [1, 239], strides = [1, 1]} : vector<1x256xi1> to vector<1x239xi1>
    %c0_i32_14 = arith.constant 0 : i32
    %38 = arith.sitofp %c0_i32_14 : i32 to bf16
    %39 = vector.shape_cast %37 : vector<1x239xi1> to vector<1x239xi1>
    %40 = vector.broadcast %39 : vector<1x239xi1> to vector<4x239xi1>
    %41 = vector.broadcast %38 : bf16 to vector<4x239xbf16>
    %42 = arith.select %40, %36, %41 : vector<4x239xi1>, vector<4x239xbf16>
    %c0_15 = arith.constant 0 : index
    %c17 = arith.constant 17 : index
    %43 = vector.load %arg13[%c0_15, %c17] : memref<108x256xbf16, #tpu.memory_space<vmem>>, vector<4x239xbf16>
    tpu.vector_store %arg13[%c0_15, %c17], %42 {strides = array<i32>} : memref<108x256xbf16, #tpu.memory_space<vmem>>, vector<4x239xbf16>,
    %cst_16 = arith.constant 0.000000e+00 : bf16
    %44 = vector.broadcast %cst_16 : bf16 to vector<4x17xbf16>
    %c0_17 = arith.constant 0 : index
    %c0_18 = arith.constant 0 : index
    %45 = vector.load %arg13[%c0_17, %c0_18] : memref<108x256xbf16, #tpu.memory_space<vmem>>, vector<4x17xbf16>
    tpu.vector_store %arg13[%c0_17, %c0_18], %44 {strides = array<i32>} : memref<108x256xbf16, #tpu.memory_space<vmem>>, vector<4x17xbf16>,
    %46 = vector.extract_strided_slice %35 {offsets = [0, 0], sizes = [4, 240], strides = [1, 1]} : vector<4x256xbf16> to vector<4x240xbf16>
    %c4 = arith.constant 4 : index
    %c16 = arith.constant 16 : index
    %47 = vector.load %arg13[%c4, %c16] : memref<108x256xbf16, #tpu.memory_space<vmem>>, vector<4x240xbf16>
    tpu.vector_store %arg13[%c4, %c16], %46 {strides = array<i32>} : memref<108x256xbf16, #tpu.memory_space<vmem>>, vector<4x240xbf16>,
    %cst_19 = arith.constant 0.000000e+00 : bf16
    %48 = vector.broadcast %cst_19 : bf16 to vector<4x16xbf16>
    %c4_20 = arith.constant 4 : index
    %c0_21 = arith.constant 0 : index
    %49 = vector.load %arg13[%c4_20, %c0_21] : memref<108x256xbf16, #tpu.memory_space<vmem>>, vector<4x16xbf16>
    tpu.vector_store %arg13[%c4_20, %c0_21], %48 {strides = array<i32>} : memref<108x256xbf16, #tpu.memory_space<vmem>>, vector<4x16xbf16>,
    %50 = vector.extract_strided_slice %35 {offsets = [0, 0], sizes = [4, 241], strides = [1, 1]} : vector<4x256xbf16> to vector<4x241xbf16>
    %51 = vector.extract_strided_slice %24 {offsets = [0, 15], sizes = [1, 241], strides = [1, 1]} : vector<1x256xi1> to vector<1x241xi1>
    %c0_i32_22 = arith.constant 0 : i32
    %52 = arith.sitofp %c0_i32_22 : i32 to bf16
    %53 = vector.shape_cast %51 : vector<1x241xi1> to vector<1x241xi1>
    %54 = vector.broadcast %53 : vector<1x241xi1> to vector<4x241xi1>
    %55 = vector.broadcast %52 : bf16 to vector<4x241xbf16>
    %56 = arith.select %54, %50, %55 : vector<4x241xi1>, vector<4x241xbf16>
    %c8 = arith.constant 8 : index
    %c15 = arith.constant 15 : index
    %57 = vector.load %arg13[%c8, %c15] : memref<108x256xbf16, #tpu.memory_space<vmem>>, vector<4x241xbf16>
    tpu.vector_store %arg13[%c8, %c15], %56 {strides = array<i32>} : memref<108x256xbf16, #tpu.memory_space<vmem>>, vector<4x241xbf16>,
    %cst_23 = arith.constant 0.000000e+00 : bf16
    %58 = vector.broadcast %cst_23 : bf16 to vector<4x15xbf16>
    %c8_24 = arith.constant 8 : index
    %c0_25 = arith.constant 0 : index
    %59 = vector.load %arg13[%c8_24, %c0_25] : memref<108x256xbf16, #tpu.memory_space<vmem>>, vector<4x15xbf16>
    tpu.vector_store %arg13[%c8_24, %c0_25], %58 {strides = array<i32>} : memref<108x256xbf16, #tpu.memory_space<vmem>>, vector<4x15xbf16>,
    %60 = vector.extract_strided_slice %35 {offsets = [0, 0], sizes = [4, 255], strides = [1, 1]} : vector<4x256xbf16> to vector<4x255xbf16>
    %61 = vector.extract_strided_slice %22 {offsets = [0, 1], sizes = [1, 255], strides = [1, 1]} : vector<1x256xi1> to vector<1x255xi1>
    %c0_i32_26 = arith.constant 0 : i32
    %62 = arith.sitofp %c0_i32_26 : i32 to bf16
    %63 = vector.shape_cast %61 : vector<1x255xi1> to vector<1x255xi1>
    %64 = vector.broadcast %63 : vector<1x255xi1> to vector<4x255xi1>
    %65 = vector.broadcast %62 : bf16 to vector<4x255xbf16>
    %66 = arith.select %64, %60, %65 : vector<4x255xi1>, vector<4x255xbf16>
    %c12 = arith.constant 12 : index
    %c1 = arith.constant 1 : index
    %67 = vector.load %arg13[%c12, %c1] : memref<108x256xbf16, #tpu.memory_space<vmem>>, vector<4x255xbf16>
    tpu.vector_store %arg13[%c12, %c1], %66 {strides = array<i32>} : memref<108x256xbf16, #tpu.memory_space<vmem>>, vector<4x255xbf16>,
    %cst_27 = arith.constant 0.000000e+00 : bf16
    %68 = vector.broadcast %cst_27 : bf16 to vector<4x1xbf16>
    %c12_28 = arith.constant 12 : index
    %c0_29 = arith.constant 0 : index
    %69 = vector.load %arg13[%c12_28, %c0_29] : memref<108x256xbf16, #tpu.memory_space<vmem>>, vector<4x1xbf16>
    tpu.vector_store %arg13[%c12_28, %c0_29], %68 {strides = array<i32>} : memref<108x256xbf16, #tpu.memory_space<vmem>>, vector<4x1xbf16>,
    %c16_30 = arith.constant 16 : index
    %c0_31 = arith.constant 0 : index
    %70 = vector.load %arg13[%c16_30, %c0_31] : memref<108x256xbf16, #tpu.memory_space<vmem>>, vector<4x256xbf16>
    tpu.vector_store %arg13[%c16_30, %c0_31], %35 {strides = array<i32>} : memref<108x256xbf16, #tpu.memory_space<vmem>>, vector<4x256xbf16>,
    %71 = vector.extract_strided_slice %35 {offsets = [0, 1], sizes = [4, 255], strides = [1, 1]} : vector<4x256xbf16> to vector<4x255xbf16>
    %72 = vector.extract_strided_slice %24 {offsets = [0, 0], sizes = [1, 255], strides = [1, 1]} : vector<1x256xi1> to vector<1x255xi1>
    %c0_i32_32 = arith.constant 0 : i32
    %73 = arith.sitofp %c0_i32_32 : i32 to bf16
    %74 = vector.shape_cast %72 : vector<1x255xi1> to vector<1x255xi1>
    %75 = vector.broadcast %74 : vector<1x255xi1> to vector<4x255xi1>
    %76 = vector.broadcast %73 : bf16 to vector<4x255xbf16>
    %77 = arith.select %75, %71, %76 : vector<4x255xi1>, vector<4x255xbf16>
    %c20 = arith.constant 20 : index
    %c0_33 = arith.constant 0 : index
    %78 = vector.load %arg13[%c20, %c0_33] : memref<108x256xbf16, #tpu.memory_space<vmem>>, vector<4x255xbf16>
    tpu.vector_store %arg13[%c20, %c0_33], %77 {strides = array<i32>} : memref<108x256xbf16, #tpu.memory_space<vmem>>, vector<4x255xbf16>,
    %cst_34 = arith.constant 0.000000e+00 : bf16
    %79 = vector.broadcast %cst_34 : bf16 to vector<4x1xbf16>
    %c20_35 = arith.constant 20 : index
    %c255 = arith.constant 255 : index
    %80 = vector.load %arg13[%c20_35, %c255] : memref<108x256xbf16, #tpu.memory_space<vmem>>, vector<4x1xbf16>
    tpu.vector_store %arg13[%c20_35, %c255], %79 {strides = array<i32>} : memref<108x256xbf16, #tpu.memory_space<vmem>>, vector<4x1xbf16>,
    %81 = vector.extract_strided_slice %35 {offsets = [0, 15], sizes = [4, 241], strides = [1, 1]} : vector<4x256xbf16> to vector<4x241xbf16>
    %82 = vector.extract_strided_slice %22 {offsets = [0, 0], sizes = [1, 241], strides = [1, 1]} : vector<1x256xi1> to vector<1x241xi1>
    %c0_i32_36 = arith.constant 0 : i32
    %83 = arith.sitofp %c0_i32_36 : i32 to bf16
    %84 = vector.shape_cast %82 : vector<1x241xi1> to vector<1x241xi1>
    %85 = vector.broadcast %84 : vector<1x241xi1> to vector<4x241xi1>
    %86 = vector.broadcast %83 : bf16 to vector<4x241xbf16>
    %87 = arith.select %85, %81, %86 : vector<4x241xi1>, vector<4x241xbf16>
    %c24 = arith.constant 24 : index
    %c0_37 = arith.constant 0 : index
    %88 = vector.load %arg13[%c24, %c0_37] : memref<108x256xbf16, #tpu.memory_space<vmem>>, vector<4x241xbf16>
    tpu.vector_store %arg13[%c24, %c0_37], %87 {strides = array<i32>} : memref<108x256xbf16, #tpu.memory_space<vmem>>, vector<4x241xbf16>,
    %cst_38 = arith.constant 0.000000e+00 : bf16
    %89 = vector.broadcast %cst_38 : bf16 to vector<4x15xbf16>
    %c24_39 = arith.constant 24 : index
    %c241 = arith.constant 241 : index
    %90 = vector.load %arg13[%c24_39, %c241] : memref<108x256xbf16, #tpu.memory_space<vmem>>, vector<4x15xbf16>
    tpu.vector_store %arg13[%c24_39, %c241], %89 {strides = array<i32>} : memref<108x256xbf16, #tpu.memory_space<vmem>>, vector<4x15xbf16>,
    %91 = vector.extract_strided_slice %35 {offsets = [0, 16], sizes = [4, 240], strides = [1, 1]} : vector<4x256xbf16> to vector<4x240xbf16>
    %c28 = arith.constant 28 : index
    %c0_40 = arith.constant 0 : index
    %92 = vector.load %arg13[%c28, %c0_40] : memref<108x256xbf16, #tpu.memory_space<vmem>>, vector<4x240xbf16>
    tpu.vector_store %arg13[%c28, %c0_40], %91 {strides = array<i32>} : memref<108x256xbf16, #tpu.memory_space<vmem>>, vector<4x240xbf16>,
    %cst_41 = arith.constant 0.000000e+00 : bf16
    %93 = vector.broadcast %cst_41 : bf16 to vector<4x16xbf16>
    %c28_42 = arith.constant 28 : index
    %c240 = arith.constant 240 : index
    %94 = vector.load %arg13[%c28_42, %c240] : memref<108x256xbf16, #tpu.memory_space<vmem>>, vector<4x16xbf16>
    tpu.vector_store %arg13[%c28_42, %c240], %93 {strides = array<i32>} : memref<108x256xbf16, #tpu.memory_space<vmem>>, vector<4x16xbf16>,
    %95 = vector.extract_strided_slice %35 {offsets = [0, 17], sizes = [4, 239], strides = [1, 1]} : vector<4x256xbf16> to vector<4x239xbf16>
    %96 = vector.extract_strided_slice %24 {offsets = [0, 0], sizes = [1, 239], strides = [1, 1]} : vector<1x256xi1> to vector<1x239xi1>
    %c0_i32_43 = arith.constant 0 : i32
    %97 = arith.sitofp %c0_i32_43 : i32 to bf16
    %98 = vector.shape_cast %96 : vector<1x239xi1> to vector<1x239xi1>
    %99 = vector.broadcast %98 : vector<1x239xi1> to vector<4x239xi1>
    %100 = vector.broadcast %97 : bf16 to vector<4x239xbf16>
    %101 = arith.select %99, %95, %100 : vector<4x239xi1>, vector<4x239xbf16>
    %c32 = arith.constant 32 : index
    %c0_44 = arith.constant 0 : index
    %102 = vector.load %arg13[%c32, %c0_44] : memref<108x256xbf16, #tpu.memory_space<vmem>>, vector<4x239xbf16>
    tpu.vector_store %arg13[%c32, %c0_44], %101 {strides = array<i32>} : memref<108x256xbf16, #tpu.memory_space<vmem>>, vector<4x239xbf16>,
    %cst_45 = arith.constant 0.000000e+00 : bf16
    %103 = vector.broadcast %cst_45 : bf16 to vector<4x17xbf16>
    %c32_46 = arith.constant 32 : index
    %c239 = arith.constant 239 : index
    %104 = vector.load %arg13[%c32_46, %c239] : memref<108x256xbf16, #tpu.memory_space<vmem>>, vector<4x17xbf16>
    tpu.vector_store %arg13[%c32_46, %c239], %103 {strides = array<i32>} : memref<108x256xbf16, #tpu.memory_space<vmem>>, vector<4x17xbf16>,
    %c0_47 = arith.constant 0 : index
    %c0_48 = arith.constant 0 : index
    %105 = vector.load %arg4[%c0_47, %c0_48] : memref<4x36xbf16, #tpu.memory_space<vmem>>, vector<4x36xbf16>
    %c0_49 = arith.constant 0 : index
    %c0_50 = arith.constant 0 : index
    %106 = vector.load %arg13[%c0_49, %c0_50] : memref<108x256xbf16, #tpu.memory_space<vmem>>, vector<36x256xbf16>
    %cst_51 = arith.constant dense<0.000000e+00> : vector<4x256xf32>
    %107 = tpu.matmul %105, %106, %cst_51 {dimension_numbers = #tpu.dot_dimension_numbers<[1], [0], [0], [1], [0, 0, 1, 1], [], []>} : vector<4x36xbf16>, vector<36x256xbf16>, vector<4x256xf32> -> vector<4x256xf32>
    %108 = arith.truncf %107 : vector<4x256xf32> to vector<4x256xbf16>
    %c4_52 = arith.constant 4 : index
    %c0_53 = arith.constant 0 : index
    %109 = vector.load %arg12[%c4_52, %c0_53] : memref<16x256xbf16, #tpu.memory_space<vmem>>, vector<4x256xbf16>
    tpu.vector_store %arg12[%c4_52, %c0_53], %108 {strides = array<i32>} : memref<16x256xbf16, #tpu.memory_space<vmem>>, vector<4x256xbf16>,
    %c0_54 = arith.constant 0 : index
    %c0_55 = arith.constant 0 : index
    %c0_56 = arith.constant 0 : index
    %110 = vector.load %arg11[%c0_54, %c0_55, %c0_56] : memref<1x12x256xf32, #tpu.memory_space<vmem>>, vector<1x4x256xf32>
    %111 = vector.shape_cast %110 : vector<1x4x256xf32> to vector<4x256xf32>
    %112 = vector.shape_cast %107 : vector<4x256xf32> to vector<1x4x256xf32>
    tpu.vector_store %arg11[%c0_54, %c0_55, %c0_56], %112 {strides = array<i32>} : memref<1x12x256xf32, #tpu.memory_space<vmem>>, vector<1x4x256xf32>,
    %c0_57 = arith.constant 0 : index
    %c0_58 = arith.constant 0 : index
    %113 = vector.load %arg12[%c0_57, %c0_58] : memref<16x256xbf16, #tpu.memory_space<vmem>>, vector<8x256xbf16>
    %114 = arith.extf %113 : vector<8x256xbf16> to vector<8x256xf32>
    %c0_59 = arith.constant 0 : index
    %c0_60 = arith.constant 0 : index
    %115 = vector.load %arg5[%c0_59, %c0_60] : memref<8x1xf32, #tpu.memory_space<vmem>>, vector<8x1xf32>
    %116 = vector.broadcast %115 : vector<8x1xf32> to vector<8x256xf32>
    %117 = arith.mulf %114, %116 : vector<8x256xf32>
    %c0_61 = arith.constant 0 : index
    %c0_62 = arith.constant 0 : index
    %118 = vector.load %arg6[%c0_61, %c0_62] : memref<8x1xf32, #tpu.memory_space<vmem>>, vector<8x1xf32>
    %119 = vector.broadcast %118 : vector<8x1xf32> to vector<8x256xf32>
    %120 = arith.addf %117, %119 : vector<8x256xf32>
    %cst_63 = arith.constant 0.000000e+00 : f32
    %121 = vector.broadcast %cst_63 : f32 to vector<8x256xf32>
    %122 = arith.maximumf %120, %121 : vector<8x256xf32>
    %123 = arith.truncf %122 : vector<8x256xf32> to vector<8x256xbf16>
    %124 = vector.extract_strided_slice %123 {offsets = [0, 0], sizes = [8, 239], strides = [1, 1]} : vector<8x256xbf16> to vector<8x239xbf16>
    %125 = vector.extract_strided_slice %22 {offsets = [0, 17], sizes = [1, 239], strides = [1, 1]} : vector<1x256xi1> to vector<1x239xi1>
    %c0_i32_64 = arith.constant 0 : i32
    %126 = arith.sitofp %c0_i32_64 : i32 to bf16
    %127 = vector.shape_cast %125 : vector<1x239xi1> to vector<1x239xi1>
    %128 = vector.broadcast %127 : vector<1x239xi1> to vector<8x239xi1>
    %129 = vector.broadcast %126 : bf16 to vector<8x239xbf16>
    %130 = arith.select %128, %124, %129 : vector<8x239xi1>, vector<8x239xbf16>
    %c0_65 = arith.constant 0 : index
    %c17_66 = arith.constant 17 : index
    %131 = vector.load %arg13[%c0_65, %c17_66] : memref<108x256xbf16, #tpu.memory_space<vmem>>, vector<8x239xbf16>
    tpu.vector_store %arg13[%c0_65, %c17_66], %130 {strides = array<i32>} : memref<108x256xbf16, #tpu.memory_space<vmem>>, vector<8x239xbf16>,
    %cst_67 = arith.constant 0.000000e+00 : bf16
    %132 = vector.broadcast %cst_67 : bf16 to vector<8x17xbf16>
    %c0_68 = arith.constant 0 : index
    %c0_69 = arith.constant 0 : index
    %133 = vector.load %arg13[%c0_68, %c0_69] : memref<108x256xbf16, #tpu.memory_space<vmem>>, vector<8x17xbf16>
    tpu.vector_store %arg13[%c0_68, %c0_69], %132 {strides = array<i32>} : memref<108x256xbf16, #tpu.memory_space<vmem>>, vector<8x17xbf16>,
    %134 = vector.extract_strided_slice %123 {offsets = [0, 0], sizes = [8, 240], strides = [1, 1]} : vector<8x256xbf16> to vector<8x240xbf16>
    %c8_70 = arith.constant 8 : index
    %c16_71 = arith.constant 16 : index
    %135 = vector.load %arg13[%c8_70, %c16_71] : memref<108x256xbf16, #tpu.memory_space<vmem>>, vector<8x240xbf16>
    tpu.vector_store %arg13[%c8_70, %c16_71], %134 {strides = array<i32>} : memref<108x256xbf16, #tpu.memory_space<vmem>>, vector<8x240xbf16>,
    %cst_72 = arith.constant 0.000000e+00 : bf16
    %136 = vector.broadcast %cst_72 : bf16 to vector<8x16xbf16>
    %c8_73 = arith.constant 8 : index
    %c0_74 = arith.constant 0 : index
    %137 = vector.load %arg13[%c8_73, %c0_74] : memref<108x256xbf16, #tpu.memory_space<vmem>>, vector<8x16xbf16>
    tpu.vector_store %arg13[%c8_73, %c0_74], %136 {strides = array<i32>} : memref<108x256xbf16, #tpu.memory_space<vmem>>, vector<8x16xbf16>,
    %138 = vector.extract_strided_slice %123 {offsets = [0, 0], sizes = [8, 241], strides = [1, 1]} : vector<8x256xbf16> to vector<8x241xbf16>
    %139 = vector.extract_strided_slice %24 {offsets = [0, 15], sizes = [1, 241], strides = [1, 1]} : vector<1x256xi1> to vector<1x241xi1>
    %c0_i32_75 = arith.constant 0 : i32
    %140 = arith.sitofp %c0_i32_75 : i32 to bf16
    %141 = vector.shape_cast %139 : vector<1x241xi1> to vector<1x241xi1>
    %142 = vector.broadcast %141 : vector<1x241xi1> to vector<8x241xi1>
    %143 = vector.broadcast %140 : bf16 to vector<8x241xbf16>
    %144 = arith.select %142, %138, %143 : vector<8x241xi1>, vector<8x241xbf16>
    %c16_76 = arith.constant 16 : index
    %c15_77 = arith.constant 15 : index
    %145 = vector.load %arg13[%c16_76, %c15_77] : memref<108x256xbf16, #tpu.memory_space<vmem>>, vector<8x241xbf16>
    tpu.vector_store %arg13[%c16_76, %c15_77], %144 {strides = array<i32>} : memref<108x256xbf16, #tpu.memory_space<vmem>>, vector<8x241xbf16>,
    %cst_78 = arith.constant 0.000000e+00 : bf16
    %146 = vector.broadcast %cst_78 : bf16 to vector<8x15xbf16>
    %c16_79 = arith.constant 16 : index
    %c0_80 = arith.constant 0 : index
    %147 = vector.load %arg13[%c16_79, %c0_80] : memref<108x256xbf16, #tpu.memory_space<vmem>>, vector<8x15xbf16>
    tpu.vector_store %arg13[%c16_79, %c0_80], %146 {strides = array<i32>} : memref<108x256xbf16, #tpu.memory_space<vmem>>, vector<8x15xbf16>,
    %148 = vector.extract_strided_slice %123 {offsets = [0, 0], sizes = [8, 255], strides = [1, 1]} : vector<8x256xbf16> to vector<8x255xbf16>
    %149 = vector.extract_strided_slice %22 {offsets = [0, 1], sizes = [1, 255], strides = [1, 1]} : vector<1x256xi1> to vector<1x255xi1>
    %c0_i32_81 = arith.constant 0 : i32
    %150 = arith.sitofp %c0_i32_81 : i32 to bf16
    %151 = vector.shape_cast %149 : vector<1x255xi1> to vector<1x255xi1>
    %152 = vector.broadcast %151 : vector<1x255xi1> to vector<8x255xi1>
    %153 = vector.broadcast %150 : bf16 to vector<8x255xbf16>
    %154 = arith.select %152, %148, %153 : vector<8x255xi1>, vector<8x255xbf16>
    %c24_82 = arith.constant 24 : index
    %c1_83 = arith.constant 1 : index
    %155 = vector.load %arg13[%c24_82, %c1_83] : memref<108x256xbf16, #tpu.memory_space<vmem>>, vector<8x255xbf16>
    tpu.vector_store %arg13[%c24_82, %c1_83], %154 {strides = array<i32>} : memref<108x256xbf16, #tpu.memory_space<vmem>>, vector<8x255xbf16>,
    %cst_84 = arith.constant 0.000000e+00 : bf16
    %156 = vector.broadcast %cst_84 : bf16 to vector<8x1xbf16>
    %c24_85 = arith.constant 24 : index
    %c0_86 = arith.constant 0 : index
    %157 = vector.load %arg13[%c24_85, %c0_86] : memref<108x256xbf16, #tpu.memory_space<vmem>>, vector<8x1xbf16>
    tpu.vector_store %arg13[%c24_85, %c0_86], %156 {strides = array<i32>} : memref<108x256xbf16, #tpu.memory_space<vmem>>, vector<8x1xbf16>,
    %c32_87 = arith.constant 32 : index
    %c0_88 = arith.constant 0 : index
    %158 = vector.load %arg13[%c32_87, %c0_88] : memref<108x256xbf16, #tpu.memory_space<vmem>>, vector<8x256xbf16>
    tpu.vector_store %arg13[%c32_87, %c0_88], %123 {strides = array<i32>} : memref<108x256xbf16, #tpu.memory_space<vmem>>, vector<8x256xbf16>,
    %159 = vector.extract_strided_slice %123 {offsets = [0, 1], sizes = [8, 255], strides = [1, 1]} : vector<8x256xbf16> to vector<8x255xbf16>
    %160 = vector.extract_strided_slice %24 {offsets = [0, 0], sizes = [1, 255], strides = [1, 1]} : vector<1x256xi1> to vector<1x255xi1>
    %c0_i32_89 = arith.constant 0 : i32
    %161 = arith.sitofp %c0_i32_89 : i32 to bf16
    %162 = vector.shape_cast %160 : vector<1x255xi1> to vector<1x255xi1>
    %163 = vector.broadcast %162 : vector<1x255xi1> to vector<8x255xi1>
    %164 = vector.broadcast %161 : bf16 to vector<8x255xbf16>
    %165 = arith.select %163, %159, %164 : vector<8x255xi1>, vector<8x255xbf16>
    %c40 = arith.constant 40 : index
    %c0_90 = arith.constant 0 : index
    %166 = vector.load %arg13[%c40, %c0_90] : memref<108x256xbf16, #tpu.memory_space<vmem>>, vector<8x255xbf16>
    tpu.vector_store %arg13[%c40, %c0_90], %165 {strides = array<i32>} : memref<108x256xbf16, #tpu.memory_space<vmem>>, vector<8x255xbf16>,
    %cst_91 = arith.constant 0.000000e+00 : bf16
    %167 = vector.broadcast %cst_91 : bf16 to vector<8x1xbf16>
    %c40_92 = arith.constant 40 : index
    %c255_93 = arith.constant 255 : index
    %168 = vector.load %arg13[%c40_92, %c255_93] : memref<108x256xbf16, #tpu.memory_space<vmem>>, vector<8x1xbf16>
    tpu.vector_store %arg13[%c40_92, %c255_93], %167 {strides = array<i32>} : memref<108x256xbf16, #tpu.memory_space<vmem>>, vector<8x1xbf16>,
    %169 = vector.extract_strided_slice %123 {offsets = [0, 15], sizes = [8, 241], strides = [1, 1]} : vector<8x256xbf16> to vector<8x241xbf16>
    %170 = vector.extract_strided_slice %22 {offsets = [0, 0], sizes = [1, 241], strides = [1, 1]} : vector<1x256xi1> to vector<1x241xi1>
    %c0_i32_94 = arith.constant 0 : i32
    %171 = arith.sitofp %c0_i32_94 : i32 to bf16
    %172 = vector.shape_cast %170 : vector<1x241xi1> to vector<1x241xi1>
    %173 = vector.broadcast %172 : vector<1x241xi1> to vector<8x241xi1>
    %174 = vector.broadcast %171 : bf16 to vector<8x241xbf16>
    %175 = arith.select %173, %169, %174 : vector<8x241xi1>, vector<8x241xbf16>
    %c48 = arith.constant 48 : index
    %c0_95 = arith.constant 0 : index
    %176 = vector.load %arg13[%c48, %c0_95] : memref<108x256xbf16, #tpu.memory_space<vmem>>, vector<8x241xbf16>
    tpu.vector_store %arg13[%c48, %c0_95], %175 {strides = array<i32>} : memref<108x256xbf16, #tpu.memory_space<vmem>>, vector<8x241xbf16>,
    %cst_96 = arith.constant 0.000000e+00 : bf16
    %177 = vector.broadcast %cst_96 : bf16 to vector<8x15xbf16>
    %c48_97 = arith.constant 48 : index
    %c241_98 = arith.constant 241 : index
    %178 = vector.load %arg13[%c48_97, %c241_98] : memref<108x256xbf16, #tpu.memory_space<vmem>>, vector<8x15xbf16>
    tpu.vector_store %arg13[%c48_97, %c241_98], %177 {strides = array<i32>} : memref<108x256xbf16, #tpu.memory_space<vmem>>, vector<8x15xbf16>,
    %179 = vector.extract_strided_slice %123 {offsets = [0, 16], sizes = [8, 240], strides = [1, 1]} : vector<8x256xbf16> to vector<8x240xbf16>
    %c56 = arith.constant 56 : index
    %c0_99 = arith.constant 0 : index
    %180 = vector.load %arg13[%c56, %c0_99] : memref<108x256xbf16, #tpu.memory_space<vmem>>, vector<8x240xbf16>
    tpu.vector_store %arg13[%c56, %c0_99], %179 {strides = array<i32>} : memref<108x256xbf16, #tpu.memory_space<vmem>>, vector<8x240xbf16>,
    %cst_100 = arith.constant 0.000000e+00 : bf16
    %181 = vector.broadcast %cst_100 : bf16 to vector<8x16xbf16>
    %c56_101 = arith.constant 56 : index
    %c240_102 = arith.constant 240 : index
    %182 = vector.load %arg13[%c56_101, %c240_102] : memref<108x256xbf16, #tpu.memory_space<vmem>>, vector<8x16xbf16>
    tpu.vector_store %arg13[%c56_101, %c240_102], %181 {strides = array<i32>} : memref<108x256xbf16, #tpu.memory_space<vmem>>, vector<8x16xbf16>,
    %183 = vector.extract_strided_slice %123 {offsets = [0, 17], sizes = [8, 239], strides = [1, 1]} : vector<8x256xbf16> to vector<8x239xbf16>
    %184 = vector.extract_strided_slice %24 {offsets = [0, 0], sizes = [1, 239], strides = [1, 1]} : vector<1x256xi1> to vector<1x239xi1>
    %c0_i32_103 = arith.constant 0 : i32
    %185 = arith.sitofp %c0_i32_103 : i32 to bf16
    %186 = vector.shape_cast %184 : vector<1x239xi1> to vector<1x239xi1>
    %187 = vector.broadcast %186 : vector<1x239xi1> to vector<8x239xi1>
    %188 = vector.broadcast %185 : bf16 to vector<8x239xbf16>
    %189 = arith.select %187, %183, %188 : vector<8x239xi1>, vector<8x239xbf16>
    %c64 = arith.constant 64 : index
    %c0_104 = arith.constant 0 : index
    %190 = vector.load %arg13[%c64, %c0_104] : memref<108x256xbf16, #tpu.memory_space<vmem>>, vector<8x239xbf16>
    tpu.vector_store %arg13[%c64, %c0_104], %189 {strides = array<i32>} : memref<108x256xbf16, #tpu.memory_space<vmem>>, vector<8x239xbf16>,
    %cst_105 = arith.constant 0.000000e+00 : bf16
    %191 = vector.broadcast %cst_105 : bf16 to vector<8x17xbf16>
    %c64_106 = arith.constant 64 : index
    %c239_107 = arith.constant 239 : index
    %192 = vector.load %arg13[%c64_106, %c239_107] : memref<108x256xbf16, #tpu.memory_space<vmem>>, vector<8x17xbf16>
    tpu.vector_store %arg13[%c64_106, %c239_107], %191 {strides = array<i32>} : memref<108x256xbf16, #tpu.memory_space<vmem>>, vector<8x17xbf16>,
    %c0_108 = arith.constant 0 : index
    %c0_109 = arith.constant 0 : index
    %193 = vector.load %arg7[%c0_108, %c0_109] : memref<4x72xbf16, #tpu.memory_space<vmem>>, vector<4x72xbf16>
    %c0_110 = arith.constant 0 : index
    %c0_111 = arith.constant 0 : index
    %194 = vector.load %arg13[%c0_110, %c0_111] : memref<108x256xbf16, #tpu.memory_space<vmem>>, vector<72x256xbf16>
    %cst_112 = arith.constant dense<0.000000e+00> : vector<4x256xf32>
    %195 = tpu.matmul %193, %194, %cst_112 {dimension_numbers = #tpu.dot_dimension_numbers<[1], [0], [0], [1], [0, 0, 1, 1], [], []>} : vector<4x72xbf16>, vector<72x256xbf16>, vector<4x256xf32> -> vector<4x256xf32>
    %196 = arith.truncf %195 : vector<4x256xf32> to vector<4x256xbf16>
    %c8_113 = arith.constant 8 : index
    %c0_114 = arith.constant 0 : index
    %197 = vector.load %arg12[%c8_113, %c0_114] : memref<16x256xbf16, #tpu.memory_space<vmem>>, vector<4x256xbf16>
    tpu.vector_store %arg12[%c8_113, %c0_114], %196 {strides = array<i32>} : memref<16x256xbf16, #tpu.memory_space<vmem>>, vector<4x256xbf16>,
    %c0_115 = arith.constant 0 : index
    %c4_116 = arith.constant 4 : index
    %c0_117 = arith.constant 0 : index
    %198 = vector.load %arg11[%c0_115, %c4_116, %c0_117] : memref<1x12x256xf32, #tpu.memory_space<vmem>>, vector<1x4x256xf32>
    %199 = vector.shape_cast %198 : vector<1x4x256xf32> to vector<4x256xf32>
    %200 = vector.shape_cast %195 : vector<4x256xf32> to vector<1x4x256xf32>
    tpu.vector_store %arg11[%c0_115, %c4_116, %c0_117], %200 {strides = array<i32>} : memref<1x12x256xf32, #tpu.memory_space<vmem>>, vector<1x4x256xf32>,
    %c0_118 = arith.constant 0 : index
    %c0_119 = arith.constant 0 : index
    %201 = vector.load %arg12[%c0_118, %c0_119] : memref<16x256xbf16, #tpu.memory_space<vmem>>, vector<12x256xbf16>
    %202 = arith.extf %201 : vector<12x256xbf16> to vector<12x256xf32>
    %c0_120 = arith.constant 0 : index
    %c0_121 = arith.constant 0 : index
    %203 = vector.load %arg8[%c0_120, %c0_121] : memref<12x1xf32, #tpu.memory_space<vmem>>, vector<12x1xf32>
    %204 = vector.broadcast %203 : vector<12x1xf32> to vector<12x256xf32>
    %205 = arith.mulf %202, %204 : vector<12x256xf32>
    %c0_122 = arith.constant 0 : index
    %c0_123 = arith.constant 0 : index
    %206 = vector.load %arg9[%c0_122, %c0_123] : memref<12x1xf32, #tpu.memory_space<vmem>>, vector<12x1xf32>
    %207 = vector.broadcast %206 : vector<12x1xf32> to vector<12x256xf32>
    %208 = arith.addf %205, %207 : vector<12x256xf32>
    %cst_124 = arith.constant 0.000000e+00 : f32
    %209 = vector.broadcast %cst_124 : f32 to vector<12x256xf32>
    %210 = arith.maximumf %208, %209 : vector<12x256xf32>
    %211 = arith.truncf %210 : vector<12x256xf32> to vector<12x256xbf16>
    %212 = vector.extract_strided_slice %211 {offsets = [0, 0], sizes = [12, 239], strides = [1, 1]} : vector<12x256xbf16> to vector<12x239xbf16>
    %213 = vector.extract_strided_slice %22 {offsets = [0, 17], sizes = [1, 239], strides = [1, 1]} : vector<1x256xi1> to vector<1x239xi1>
    %c0_i32_125 = arith.constant 0 : i32
    %214 = arith.sitofp %c0_i32_125 : i32 to bf16
    %215 = vector.shape_cast %213 : vector<1x239xi1> to vector<1x239xi1>
    %216 = vector.broadcast %215 : vector<1x239xi1> to vector<12x239xi1>
    %217 = vector.broadcast %214 : bf16 to vector<12x239xbf16>
    %218 = arith.select %216, %212, %217 : vector<12x239xi1>, vector<12x239xbf16>
    %c0_126 = arith.constant 0 : index
    %c17_127 = arith.constant 17 : index
    %219 = vector.load %arg13[%c0_126, %c17_127] : memref<108x256xbf16, #tpu.memory_space<vmem>>, vector<12x239xbf16>
    tpu.vector_store %arg13[%c0_126, %c17_127], %218 {strides = array<i32>} : memref<108x256xbf16, #tpu.memory_space<vmem>>, vector<12x239xbf16>,
    %cst_128 = arith.constant 0.000000e+00 : bf16
    %220 = vector.broadcast %cst_128 : bf16 to vector<12x17xbf16>
    %c0_129 = arith.constant 0 : index
    %c0_130 = arith.constant 0 : index
    %221 = vector.load %arg13[%c0_129, %c0_130] : memref<108x256xbf16, #tpu.memory_space<vmem>>, vector<12x17xbf16>
    tpu.vector_store %arg13[%c0_129, %c0_130], %220 {strides = array<i32>} : memref<108x256xbf16, #tpu.memory_space<vmem>>, vector<12x17xbf16>,
    %222 = vector.extract_strided_slice %211 {offsets = [0, 0], sizes = [12, 240], strides = [1, 1]} : vector<12x256xbf16> to vector<12x240xbf16>
    %c12_131 = arith.constant 12 : index
    %c16_132 = arith.constant 16 : index
    %223 = vector.load %arg13[%c12_131, %c16_132] : memref<108x256xbf16, #tpu.memory_space<vmem>>, vector<12x240xbf16>
    tpu.vector_store %arg13[%c12_131, %c16_132], %222 {strides = array<i32>} : memref<108x256xbf16, #tpu.memory_space<vmem>>, vector<12x240xbf16>,
    %cst_133 = arith.constant 0.000000e+00 : bf16
    %224 = vector.broadcast %cst_133 : bf16 to vector<12x16xbf16>
    %c12_134 = arith.constant 12 : index
    %c0_135 = arith.constant 0 : index
    %225 = vector.load %arg13[%c12_134, %c0_135] : memref<108x256xbf16, #tpu.memory_space<vmem>>, vector<12x16xbf16>
    tpu.vector_store %arg13[%c12_134, %c0_135], %224 {strides = array<i32>} : memref<108x256xbf16, #tpu.memory_space<vmem>>, vector<12x16xbf16>,
    %226 = vector.extract_strided_slice %211 {offsets = [0, 0], sizes = [12, 241], strides = [1, 1]} : vector<12x256xbf16> to vector<12x241xbf16>
    %227 = vector.extract_strided_slice %24 {offsets = [0, 15], sizes = [1, 241], strides = [1, 1]} : vector<1x256xi1> to vector<1x241xi1>
    %c0_i32_136 = arith.constant 0 : i32
    %228 = arith.sitofp %c0_i32_136 : i32 to bf16
    %229 = vector.shape_cast %227 : vector<1x241xi1> to vector<1x241xi1>
    %230 = vector.broadcast %229 : vector<1x241xi1> to vector<12x241xi1>
    %231 = vector.broadcast %228 : bf16 to vector<12x241xbf16>
    %232 = arith.select %230, %226, %231 : vector<12x241xi1>, vector<12x241xbf16>
    %c24_137 = arith.constant 24 : index
    %c15_138 = arith.constant 15 : index
    %233 = vector.load %arg13[%c24_137, %c15_138] : memref<108x256xbf16, #tpu.memory_space<vmem>>, vector<12x241xbf16>
    tpu.vector_store %arg13[%c24_137, %c15_138], %232 {strides = array<i32>} : memref<108x256xbf16, #tpu.memory_space<vmem>>, vector<12x241xbf16>,
    %cst_139 = arith.constant 0.000000e+00 : bf16
    %234 = vector.broadcast %cst_139 : bf16 to vector<12x15xbf16>
    %c24_140 = arith.constant 24 : index
    %c0_141 = arith.constant 0 : index
    %235 = vector.load %arg13[%c24_140, %c0_141] : memref<108x256xbf16, #tpu.memory_space<vmem>>, vector<12x15xbf16>
    tpu.vector_store %arg13[%c24_140, %c0_141], %234 {strides = array<i32>} : memref<108x256xbf16, #tpu.memory_space<vmem>>, vector<12x15xbf16>,
    %236 = vector.extract_strided_slice %211 {offsets = [0, 0], sizes = [12, 255], strides = [1, 1]} : vector<12x256xbf16> to vector<12x255xbf16>
    %237 = vector.extract_strided_slice %22 {offsets = [0, 1], sizes = [1, 255], strides = [1, 1]} : vector<1x256xi1> to vector<1x255xi1>
    %c0_i32_142 = arith.constant 0 : i32
    %238 = arith.sitofp %c0_i32_142 : i32 to bf16
    %239 = vector.shape_cast %237 : vector<1x255xi1> to vector<1x255xi1>
    %240 = vector.broadcast %239 : vector<1x255xi1> to vector<12x255xi1>
    %241 = vector.broadcast %238 : bf16 to vector<12x255xbf16>
    %242 = arith.select %240, %236, %241 : vector<12x255xi1>, vector<12x255xbf16>
    %c36 = arith.constant 36 : index
    %c1_143 = arith.constant 1 : index
    %243 = vector.load %arg13[%c36, %c1_143] : memref<108x256xbf16, #tpu.memory_space<vmem>>, vector<12x255xbf16>
    tpu.vector_store %arg13[%c36, %c1_143], %242 {strides = array<i32>} : memref<108x256xbf16, #tpu.memory_space<vmem>>, vector<12x255xbf16>,
    %cst_144 = arith.constant 0.000000e+00 : bf16
    %244 = vector.broadcast %cst_144 : bf16 to vector<12x1xbf16>
    %c36_145 = arith.constant 36 : index
    %c0_146 = arith.constant 0 : index
    %245 = vector.load %arg13[%c36_145, %c0_146] : memref<108x256xbf16, #tpu.memory_space<vmem>>, vector<12x1xbf16>
    tpu.vector_store %arg13[%c36_145, %c0_146], %244 {strides = array<i32>} : memref<108x256xbf16, #tpu.memory_space<vmem>>, vector<12x1xbf16>,
    %c48_147 = arith.constant 48 : index
    %c0_148 = arith.constant 0 : index
    %246 = vector.load %arg13[%c48_147, %c0_148] : memref<108x256xbf16, #tpu.memory_space<vmem>>, vector<12x256xbf16>
    tpu.vector_store %arg13[%c48_147, %c0_148], %211 {strides = array<i32>} : memref<108x256xbf16, #tpu.memory_space<vmem>>, vector<12x256xbf16>,
    %247 = vector.extract_strided_slice %211 {offsets = [0, 1], sizes = [12, 255], strides = [1, 1]} : vector<12x256xbf16> to vector<12x255xbf16>
    %248 = vector.extract_strided_slice %24 {offsets = [0, 0], sizes = [1, 255], strides = [1, 1]} : vector<1x256xi1> to vector<1x255xi1>
    %c0_i32_149 = arith.constant 0 : i32
    %249 = arith.sitofp %c0_i32_149 : i32 to bf16
    %250 = vector.shape_cast %248 : vector<1x255xi1> to vector<1x255xi1>
    %251 = vector.broadcast %250 : vector<1x255xi1> to vector<12x255xi1>
    %252 = vector.broadcast %249 : bf16 to vector<12x255xbf16>
    %253 = arith.select %251, %247, %252 : vector<12x255xi1>, vector<12x255xbf16>
    %c60 = arith.constant 60 : index
    %c0_150 = arith.constant 0 : index
    %254 = vector.load %arg13[%c60, %c0_150] : memref<108x256xbf16, #tpu.memory_space<vmem>>, vector<12x255xbf16>
    tpu.vector_store %arg13[%c60, %c0_150], %253 {strides = array<i32>} : memref<108x256xbf16, #tpu.memory_space<vmem>>, vector<12x255xbf16>,
    %cst_151 = arith.constant 0.000000e+00 : bf16
    %255 = vector.broadcast %cst_151 : bf16 to vector<12x1xbf16>
    %c60_152 = arith.constant 60 : index
    %c255_153 = arith.constant 255 : index
    %256 = vector.load %arg13[%c60_152, %c255_153] : memref<108x256xbf16, #tpu.memory_space<vmem>>, vector<12x1xbf16>
    tpu.vector_store %arg13[%c60_152, %c255_153], %255 {strides = array<i32>} : memref<108x256xbf16, #tpu.memory_space<vmem>>, vector<12x1xbf16>,
    %257 = vector.extract_strided_slice %211 {offsets = [0, 15], sizes = [12, 241], strides = [1, 1]} : vector<12x256xbf16> to vector<12x241xbf16>
    %258 = vector.extract_strided_slice %22 {offsets = [0, 0], sizes = [1, 241], strides = [1, 1]} : vector<1x256xi1> to vector<1x241xi1>
    %c0_i32_154 = arith.constant 0 : i32
    %259 = arith.sitofp %c0_i32_154 : i32 to bf16
    %260 = vector.shape_cast %258 : vector<1x241xi1> to vector<1x241xi1>
    %261 = vector.broadcast %260 : vector<1x241xi1> to vector<12x241xi1>
    %262 = vector.broadcast %259 : bf16 to vector<12x241xbf16>
    %263 = arith.select %261, %257, %262 : vector<12x241xi1>, vector<12x241xbf16>
    %c72 = arith.constant 72 : index
    %c0_155 = arith.constant 0 : index
    %264 = vector.load %arg13[%c72, %c0_155] : memref<108x256xbf16, #tpu.memory_space<vmem>>, vector<12x241xbf16>
    tpu.vector_store %arg13[%c72, %c0_155], %263 {strides = array<i32>} : memref<108x256xbf16, #tpu.memory_space<vmem>>, vector<12x241xbf16>,
    %cst_156 = arith.constant 0.000000e+00 : bf16
    %265 = vector.broadcast %cst_156 : bf16 to vector<12x15xbf16>
    %c72_157 = arith.constant 72 : index
    %c241_158 = arith.constant 241 : index
    %266 = vector.load %arg13[%c72_157, %c241_158] : memref<108x256xbf16, #tpu.memory_space<vmem>>, vector<12x15xbf16>
    tpu.vector_store %arg13[%c72_157, %c241_158], %265 {strides = array<i32>} : memref<108x256xbf16, #tpu.memory_space<vmem>>, vector<12x15xbf16>,
    %267 = vector.extract_strided_slice %211 {offsets = [0, 16], sizes = [12, 240], strides = [1, 1]} : vector<12x256xbf16> to vector<12x240xbf16>
    %c84 = arith.constant 84 : index
    %c0_159 = arith.constant 0 : index
    %268 = vector.load %arg13[%c84, %c0_159] : memref<108x256xbf16, #tpu.memory_space<vmem>>, vector<12x240xbf16>
    tpu.vector_store %arg13[%c84, %c0_159], %267 {strides = array<i32>} : memref<108x256xbf16, #tpu.memory_space<vmem>>, vector<12x240xbf16>,
    %cst_160 = arith.constant 0.000000e+00 : bf16
    %269 = vector.broadcast %cst_160 : bf16 to vector<12x16xbf16>
    %c84_161 = arith.constant 84 : index
    %c240_162 = arith.constant 240 : index
    %270 = vector.load %arg13[%c84_161, %c240_162] : memref<108x256xbf16, #tpu.memory_space<vmem>>, vector<12x16xbf16>
    tpu.vector_store %arg13[%c84_161, %c240_162], %269 {strides = array<i32>} : memref<108x256xbf16, #tpu.memory_space<vmem>>, vector<12x16xbf16>,
    %271 = vector.extract_strided_slice %211 {offsets = [0, 17], sizes = [12, 239], strides = [1, 1]} : vector<12x256xbf16> to vector<12x239xbf16>
    %272 = vector.extract_strided_slice %24 {offsets = [0, 0], sizes = [1, 239], strides = [1, 1]} : vector<1x256xi1> to vector<1x239xi1>
    %c0_i32_163 = arith.constant 0 : i32
    %273 = arith.sitofp %c0_i32_163 : i32 to bf16
    %274 = vector.shape_cast %272 : vector<1x239xi1> to vector<1x239xi1>
    %275 = vector.broadcast %274 : vector<1x239xi1> to vector<12x239xi1>
    %276 = vector.broadcast %273 : bf16 to vector<12x239xbf16>
    %277 = arith.select %275, %271, %276 : vector<12x239xi1>, vector<12x239xbf16>
    %c96 = arith.constant 96 : index
    %c0_164 = arith.constant 0 : index
    %278 = vector.load %arg13[%c96, %c0_164] : memref<108x256xbf16, #tpu.memory_space<vmem>>, vector<12x239xbf16>
    tpu.vector_store %arg13[%c96, %c0_164], %277 {strides = array<i32>} : memref<108x256xbf16, #tpu.memory_space<vmem>>, vector<12x239xbf16>,
    %cst_165 = arith.constant 0.000000e+00 : bf16
    %279 = vector.broadcast %cst_165 : bf16 to vector<12x17xbf16>
    %c96_166 = arith.constant 96 : index
    %c239_167 = arith.constant 239 : index
    %280 = vector.load %arg13[%c96_166, %c239_167] : memref<108x256xbf16, #tpu.memory_space<vmem>>, vector<12x17xbf16>
    tpu.vector_store %arg13[%c96_166, %c239_167], %279 {strides = array<i32>} : memref<108x256xbf16, #tpu.memory_space<vmem>>, vector<12x17xbf16>,
    %c0_168 = arith.constant 0 : index
    %c0_169 = arith.constant 0 : index
    %281 = vector.load %arg10[%c0_168, %c0_169] : memref<4x108xbf16, #tpu.memory_space<vmem>>, vector<4x108xbf16>
    %c0_170 = arith.constant 0 : index
    %c0_171 = arith.constant 0 : index
    %282 = vector.load %arg13[%c0_170, %c0_171] : memref<108x256xbf16, #tpu.memory_space<vmem>>, vector<108x256xbf16>
    %cst_172 = arith.constant dense<0.000000e+00> : vector<4x256xf32>
    %283 = tpu.matmul %281, %282, %cst_172 {dimension_numbers = #tpu.dot_dimension_numbers<[1], [0], [0], [1], [0, 0, 1, 1], [], []>} : vector<4x108xbf16>, vector<108x256xbf16>, vector<4x256xf32> -> vector<4x256xf32>
    %284 = arith.truncf %283 : vector<4x256xf32> to vector<4x256xbf16>
    %c12_173 = arith.constant 12 : index
    %c0_174 = arith.constant 0 : index
    %285 = vector.load %arg12[%c12_173, %c0_174] : memref<16x256xbf16, #tpu.memory_space<vmem>>, vector<4x256xbf16>
    tpu.vector_store %arg12[%c12_173, %c0_174], %284 {strides = array<i32>} : memref<16x256xbf16, #tpu.memory_space<vmem>>, vector<4x256xbf16>,
    %c0_175 = arith.constant 0 : index
    %c8_176 = arith.constant 8 : index
    %c0_177 = arith.constant 0 : index
    %286 = vector.load %arg11[%c0_175, %c8_176, %c0_177] : memref<1x12x256xf32, #tpu.memory_space<vmem>>, vector<1x4x256xf32>
    %287 = vector.shape_cast %286 : vector<1x4x256xf32> to vector<4x256xf32>
    %288 = vector.shape_cast %283 : vector<4x256xf32> to vector<1x4x256xf32>
    tpu.vector_store %arg11[%c0_175, %c8_176, %c0_177], %288 {strides = array<i32>} : memref<1x12x256xf32, #tpu.memory_space<vmem>>, vector<1x4x256xf32>,
    return
  }
  func.func @transform_0(%arg0: i32) -> (i32, i32, i32) {
    %c0_i32 = arith.constant 0 : i32
    %c0_i32_0 = arith.constant 0 : i32
    %c0_i32_1 = arith.constant 0 : i32
    return %arg0, %c0_i32, %c0_i32_0 : i32, i32, i32
  }
  func.func @transform_1(%arg0: i32) -> (i32, i32) {
    %c0_i32 = arith.constant 0 : i32
    %c0_i32_0 = arith.constant 0 : i32
    %c0_i32_1 = arith.constant 0 : i32
    return %c0_i32, %c0_i32_0 : i32, i32
  }
  func.func @transform_2(%arg0: i32) -> (i32, i32) {
    %c0_i32 = arith.constant 0 : i32
    %c0_i32_0 = arith.constant 0 : i32
    %c0_i32_1 = arith.constant 0 : i32
    return %c0_i32, %c0_i32_0 : i32, i32
  }
  func.func @transform_3(%arg0: i32) -> (i32, i32) {
    %c0_i32 = arith.constant 0 : i32
    %c0_i32_0 = arith.constant 0 : i32
    %c0_i32_1 = arith.constant 0 : i32
    return %c0_i32, %c0_i32_0 : i32, i32
  }
  func.func @transform_4(%arg0: i32) -> (i32, i32) {
    %c0_i32 = arith.constant 0 : i32
    %c0_i32_0 = arith.constant 0 : i32
    %c0_i32_1 = arith.constant 0 : i32
    return %c0_i32, %c0_i32_0 : i32, i32
  }
  func.func @transform_5(%arg0: i32) -> (i32, i32) {
    %c0_i32 = arith.constant 0 : i32
    %c0_i32_0 = arith.constant 0 : i32
    %c0_i32_1 = arith.constant 0 : i32
    return %c0_i32, %c0_i32_0 : i32, i32
  }
  func.func @transform_6(%arg0: i32) -> (i32, i32) {
    %c0_i32 = arith.constant 0 : i32
    %c0_i32_0 = arith.constant 0 : i32
    %c0_i32_1 = arith.constant 0 : i32
    return %c0_i32, %c0_i32_0 : i32, i32
  }
  func.func @transform_7(%arg0: i32) -> (i32, i32) {
    %c0_i32 = arith.constant 0 : i32
    %c0_i32_0 = arith.constant 0 : i32
    %c0_i32_1 = arith.constant 0 : i32
    return %c0_i32, %c0_i32_0 : i32, i32
  }
  func.func @transform_8(%arg0: i32) -> (i32, i32) {
    %c0_i32 = arith.constant 0 : i32
    %c0_i32_0 = arith.constant 0 : i32
    %c0_i32_1 = arith.constant 0 : i32
    return %c0_i32, %c0_i32_0 : i32, i32
  }
  func.func @transform_9(%arg0: i32) -> (i32, i32) {
    %c0_i32 = arith.constant 0 : i32
    %c0_i32_0 = arith.constant 0 : i32
    %c0_i32_1 = arith.constant 0 : i32
    return %c0_i32, %c0_i32_0 : i32, i32
  }
  func.func @transform_10(%arg0: i32) -> (i32, i32, i32) {
    %c0_i32 = arith.constant 0 : i32
    %c0_i32_0 = arith.constant 0 : i32
    %c0_i32_1 = arith.constant 0 : i32
    return %arg0, %c0_i32, %c0_i32_0 : i32, i32, i32
  }
}

</mosaic_0001>

<llo_original>
// kernel: tpu_custom_call.1
$region0: #{tpu_custom_call.1}
  #allocation0 [shape = 'u32[]', space=smem, size = 0x4, offset = 0x4, fixed_abs, tag = 'smem constant byte address 0x4 - core index']
  #allocation1 [shape = 'u32[144,128]{1,0:T(1,128)}', space=vmem, size = 0x12000, scoped, tag = 'internal scratch']
  #allocation2 [shape = 'bf16[16,256]{1,0:T(8,128)(2,1)}', space=vmem, size = 0x2000, scoped, tag = 'scratch operand']
  #allocation3 [shape = 'bf16[108,256]{1,0:T(8,128)(2,1)}', space=vmem, size = 0xe000, scoped, tag = 'scratch operand']
  %s0 = inlined_call_operand.vmem [shape: f32[2,4,256], index: 0, kind: input, shape index: {}]
  %s1 = inlined_call_operand.vmem [shape: f32[4,1], index: 1, kind: input, shape index: {}]
  %s2 = inlined_call_operand.vmem [shape: f32[4,1], index: 2, kind: input, shape index: {}]
  %s3 = inlined_call_operand.vmem [shape: bf16[4,36], index: 3, kind: input, shape index: {}]
  %s4 = inlined_call_operand.vmem [shape: f32[8,1], index: 4, kind: input, shape index: {}]
  %s5 = inlined_call_operand.vmem [shape: f32[8,1], index: 5, kind: input, shape index: {}]
  %s6 = inlined_call_operand.vmem [shape: bf16[4,72], index: 6, kind: input, shape index: {}]
  %s7 = inlined_call_operand.vmem [shape: f32[12,1], index: 7, kind: input, shape index: {}]
  %s8 = inlined_call_operand.vmem [shape: f32[12,1], index: 8, kind: input, shape index: {}]
  %s9 = inlined_call_operand.vmem [shape: bf16[4,108], index: 9, kind: input, shape index: {}]
  %s10 = inlined_call_operand.vmem [shape: f32[2,12,256], index: 10, kind: output, shape index: {}]
  %s11 = sld [smem:[#allocation0]]
  $region73: #{tpu_custom_call.1} parent=0
    _
  %s13 = ssub.s32 1, %s11
  %s14 = scalar_select 0, %s13, %s11
  loop: start=0, step=1, limit=4
  $region2: #{tpu_custom_call.1} parent=0 // loop_pre_header
    _
  $region3: #{tpu_custom_call.1} parent=0 // loop_header
    %s16 = sphi 0, %s20
    %p17 = scmp.ge.s32.totalorder %s16, 4
    %s26 = sphi 0, %s28
    %s29 = sphi 0, %s26
    %s30 = sphi 0, %s29
    %s46 = sphi 0, %s30
    %s50 = sphi 0, %s50
    %s52 = sphi 0, %s50
    %s53 = sphi 0, %s52
    %s67 = sphi 0, %s53
    %s71 = sphi 0, %s71
    %s73 = sphi 0, %s71
    %s74 = sphi 0, %s73
    %s88 = sphi 0, %s74
    %s92 = sphi 0, %s92
    %s94 = sphi 0, %s92
    %s95 = sphi 0, %s94
    %s109 = sphi 0, %s95
    %s113 = sphi 0, %s113
    %s115 = sphi 0, %s113
    %s116 = sphi 0, %s115
    %s130 = sphi 0, %s116
    %s134 = sphi 0, %s134
    %s136 = sphi 0, %s134
    %s137 = sphi 0, %s136
    %s151 = sphi 0, %s137
    %s155 = sphi 0, %s155
    %s157 = sphi 0, %s155
    %s158 = sphi 0, %s157
    %s172 = sphi 0, %s158
    %s176 = sphi 0, %s176
    %s178 = sphi 0, %s176
    %s179 = sphi 0, %s178
    %s193 = sphi 0, %s179
    %s197 = sphi 0, %s197
    %s199 = sphi 0, %s197
    %s200 = sphi 0, %s199
    %s214 = sphi 0, %s200
    %s218 = sphi 0, %s218
    %s220 = sphi 0, %s218
    %s221 = sphi 0, %s220
    %s235 = sphi 0, %s221
    %s241 = sphi 0, %s243
    %s244 = sphi 0, %s241
    %s245 = sphi 0, %s244
    %s261 = sphi 0, %s245
  $region4: #{tpu_custom_call.1} parent=0 // loop_header_branch
    %19 = sbr.rel (%p17) target = $region8
  $region5: #{tpu_custom_call.1} parent=0 // loop_body
    %s21 = ssub.s32 %s16, 1
    %s22 = ssub.s32 %s16, 2
    %s23 = sadd.s32 %s16, 1
    %s24 = ssub.s32 %s16, %s23
    %p25 = scmp.eq.s32.totalorder %s24, 0
    %s27 = sadd.s32 %s26, 1
    %s28 = scalar_select %p25, %s26, %s27
    %p31 = pneg %p25
    %p32 = scmp.eq.s32.totalorder %s16, 1
    %p33 = por %p31, %p32
    %p34 = scmp.ne.s32.totalorder %s26, %s29
    %p35 = scmp.eq.s32.totalorder %s16, 0
    %p36 = por %p34, %p35
    %p37 = scmp.ne.s32.totalorder %s26, %s29
    %p38 = scmp.eq.s32.totalorder %s21, 1
    %p39 = por %p37, %p38
    %p40 = scmp.ne.s32.totalorder %s29, %s30
    %p41 = scmp.eq.s32.totalorder %s21, 0
    %p42 = por %p40, %p41
    %p43 = scmp.ne.s32.totalorder %s29, %s30
    %p44 = scmp.eq.s32.totalorder %s22, 1
    %p45 = por %p43, %p44
    %p47 = scmp.ne.s32.totalorder %s30, %s46
    %p48 = scmp.eq.s32.totalorder %s22, 0
    %p49 = por %p47, %p48
    %s51 = sadd.s32 %s50, 1
    %p54 = scmp.eq.s32.totalorder %s16, 1
    %p55 = scmp.ne.s32.totalorder %s50, %s52
    %p56 = scmp.eq.s32.totalorder %s16, 0
    %p57 = por %p55, %p56
    %p58 = scmp.ne.s32.totalorder %s50, %s52
    %p59 = scmp.eq.s32.totalorder %s21, 1
    %p60 = por %p58, %p59
    %p61 = scmp.ne.s32.totalorder %s52, %s53
    %p62 = scmp.eq.s32.totalorder %s21, 0
    %p63 = por %p61, %p62
    %p64 = scmp.ne.s32.totalorder %s52, %s53
    %p65 = scmp.eq.s32.totalorder %s22, 1
    %p66 = por %p64, %p65
    %p68 = scmp.ne.s32.totalorder %s53, %s67
    %p69 = scmp.eq.s32.totalorder %s22, 0
    %p70 = por %p68, %p69
    %s72 = sadd.s32 %s71, 1
    %p75 = scmp.eq.s32.totalorder %s16, 1
    %p76 = scmp.ne.s32.totalorder %s71, %s73
    %p77 = scmp.eq.s32.totalorder %s16, 0
    %p78 = por %p76, %p77
    %p79 = scmp.ne.s32.totalorder %s71, %s73
    %p80 = scmp.eq.s32.totalorder %s21, 1
    %p81 = por %p79, %p80
    %p82 = scmp.ne.s32.totalorder %s73, %s74
    %p83 = scmp.eq.s32.totalorder %s21, 0
    %p84 = por %p82, %p83
    %p85 = scmp.ne.s32.totalorder %s73, %s74
    %p86 = scmp.eq.s32.totalorder %s22, 1
    %p87 = por %p85, %p86
    %p89 = scmp.ne.s32.totalorder %s74, %s88
    %p90 = scmp.eq.s32.totalorder %s22, 0
    %p91 = por %p89, %p90
    %s93 = sadd.s32 %s92, 1
    %p96 = scmp.eq.s32.totalorder %s16, 1
    %p97 = scmp.ne.s32.totalorder %s92, %s94
    %p98 = scmp.eq.s32.totalorder %s16, 0
    %p99 = por %p97, %p98
    %p100 = scmp.ne.s32.totalorder %s92, %s94
    %p101 = scmp.eq.s32.totalorder %s21, 1
    %p102 = por %p100, %p101
    %p103 = scmp.ne.s32.totalorder %s94, %s95
    %p104 = scmp.eq.s32.totalorder %s21, 0
    %p105 = por %p103, %p104
    %p106 = scmp.ne.s32.totalorder %s94, %s95
    %p107 = scmp.eq.s32.totalorder %s22, 1
    %p108 = por %p106, %p107
    %p110 = scmp.ne.s32.totalorder %s95, %s109
    %p111 = scmp.eq.s32.totalorder %s22, 0
    %p112 = por %p110, %p111
    %s114 = sadd.s32 %s113, 1
    %p117 = scmp.eq.s32.totalorder %s16, 1
    %p118 = scmp.ne.s32.totalorder %s113, %s115
    %p119 = scmp.eq.s32.totalorder %s16, 0
    %p120 = por %p118, %p119
    %p121 = scmp.ne.s32.totalorder %s113, %s115
    %p122 = scmp.eq.s32.totalorder %s21, 1
    %p123 = por %p121, %p122
    %p124 = scmp.ne.s32.totalorder %s115, %s116
    %p125 = scmp.eq.s32.totalorder %s21, 0
    %p126 = por %p124, %p125
    %p127 = scmp.ne.s32.totalorder %s115, %s116
    %p128 = scmp.eq.s32.totalorder %s22, 1
    %p129 = por %p127, %p128
    %p131 = scmp.ne.s32.totalorder %s116, %s130
    %p132 = scmp.eq.s32.totalorder %s22, 0
    %p133 = por %p131, %p132
    %s135 = sadd.s32 %s134, 1
    %p138 = scmp.eq.s32.totalorder %s16, 1
    %p139 = scmp.ne.s32.totalorder %s134, %s136
    %p140 = scmp.eq.s32.totalorder %s16, 0
    %p141 = por %p139, %p140
    %p142 = scmp.ne.s32.totalorder %s134, %s136
    %p143 = scmp.eq.s32.totalorder %s21, 1
    %p144 = por %p142, %p143
    %p145 = scmp.ne.s32.totalorder %s136, %s137
    %p146 = scmp.eq.s32.totalorder %s21, 0
    %p147 = por %p145, %p146
    %p148 = scmp.ne.s32.totalorder %s136, %s137
    %p149 = scmp.eq.s32.totalorder %s22, 1
    %p150 = por %p148, %p149
    %p152 = scmp.ne.s32.totalorder %s137, %s151
    %p153 = scmp.eq.s32.totalorder %s22, 0
    %p154 = por %p152, %p153
    %s156 = sadd.s32 %s155, 1
    %p159 = scmp.eq.s32.totalorder %s16, 1
    %p160 = scmp.ne.s32.totalorder %s155, %s157
    %p161 = scmp.eq.s32.totalorder %s16, 0
    %p162 = por %p160, %p161
    %p163 = scmp.ne.s32.totalorder %s155, %s157
    %p164 = scmp.eq.s32.totalorder %s21, 1
    %p165 = por %p163, %p164
    %p166 = scmp.ne.s32.totalorder %s157, %s158
    %p167 = scmp.eq.s32.totalorder %s21, 0
    %p168 = por %p166, %p167
    %p169 = scmp.ne.s32.totalorder %s157, %s158
    %p170 = scmp.eq.s32.totalorder %s22, 1
    %p171 = por %p169, %p170
    %p173 = scmp.ne.s32.totalorder %s158, %s172
    %p174 = scmp.eq.s32.totalorder %s22, 0
    %p175 = por %p173, %p174
    %s177 = sadd.s32 %s176, 1
    %p180 = scmp.eq.s32.totalorder %s16, 1
    %p181 = scmp.ne.s32.totalorder %s176, %s178
    %p182 = scmp.eq.s32.totalorder %s16, 0
    %p183 = por %p181, %p182
    %p184 = scmp.ne.s32.totalorder %s176, %s178
    %p185 = scmp.eq.s32.totalorder %s21, 1
    %p186 = por %p184, %p185
    %p187 = scmp.ne.s32.totalorder %s178, %s179
    %p188 = scmp.eq.s32.totalorder %s21, 0
    %p189 = por %p187, %p188
    %p190 = scmp.ne.s32.totalorder %s178, %s179
    %p191 = scmp.eq.s32.totalorder %s22, 1
    %p192 = por %p190, %p191
    %p194 = scmp.ne.s32.totalorder %s179, %s193
    %p195 = scmp.eq.s32.totalorder %s22, 0
    %p196 = por %p194, %p195
    %s198 = sadd.s32 %s197, 1
    %p201 = scmp.eq.s32.totalorder %s16, 1
    %p202 = scmp.ne.s32.totalorder %s197, %s199
    %p203 = scmp.eq.s32.totalorder %s16, 0
    %p204 = por %p202, %p203
    %p205 = scmp.ne.s32.totalorder %s197, %s199
    %p206 = scmp.eq.s32.totalorder %s21, 1
    %p207 = por %p205, %p206
    %p208 = scmp.ne.s32.totalorder %s199, %s200
    %p209 = scmp.eq.s32.totalorder %s21, 0
    %p210 = por %p208, %p209
    %p211 = scmp.ne.s32.totalorder %s199, %s200
    %p212 = scmp.eq.s32.totalorder %s22, 1
    %p213 = por %p211, %p212
    %p215 = scmp.ne.s32.totalorder %s200, %s214
    %p216 = scmp.eq.s32.totalorder %s22, 0
    %p217 = por %p215, %p216
    %s219 = sadd.s32 %s218, 1
    %p222 = scmp.eq.s32.totalorder %s16, 1
    %p223 = scmp.ne.s32.totalorder %s218, %s220
    %p224 = scmp.eq.s32.totalorder %s16, 0
    %p225 = por %p223, %p224
    %p226 = scmp.ne.s32.totalorder %s218, %s220
    %p227 = scmp.eq.s32.totalorder %s21, 1
    %p228 = por %p226, %p227
    %p229 = scmp.ne.s32.totalorder %s220, %s221
    %p230 = scmp.eq.s32.totalorder %s21, 0
    %p231 = por %p229, %p230
    %p232 = scmp.ne.s32.totalorder %s220, %s221
    %p233 = scmp.eq.s32.totalorder %s22, 1
    %p234 = por %p232, %p233
    %p236 = scmp.ne.s32.totalorder %s221, %s235
    %p237 = scmp.eq.s32.totalorder %s22, 0
    %p238 = por %p236, %p237
    %s239 = ssub.s32 %s16, %s23
    %p240 = scmp.eq.s32.totalorder %s239, 0
    %s242 = sadd.s32 %s241, 1
    %s243 = scalar_select %p240, %s241, %s242
    %p246 = pneg %p240
    %p247 = scmp.eq.s32.totalorder %s16, 1
    %p248 = por %p246, %p247
    %p249 = scmp.ne.s32.totalorder %s241, %s244
    %p250 = scmp.eq.s32.totalorder %s16, 0
    %p251 = por %p249, %p250
    %p252 = scmp.ne.s32.totalorder %s241, %s244
    %p253 = scmp.eq.s32.totalorder %s21, 1
    %p254 = por %p252, %p253
    %p255 = scmp.ne.s32.totalorder %s244, %s245
    %p256 = scmp.eq.s32.totalorder %s21, 0
    %p257 = por %p255, %p256
    %p258 = scmp.ne.s32.totalorder %s244, %s245
    %p259 = scmp.eq.s32.totalorder %s22, 1
    %p260 = por %p258, %p259
    %p262 = scmp.ne.s32.totalorder %s245, %s261
    %p263 = scmp.eq.s32.totalorder %s22, 0
    %p264 = por %p262, %p263
    %p265 = scmp.le.s32.totalorder 1, %s16
    %p266 = scmp.lt.s32.totalorder %s16, 3
    %p267 = pnand %p265, %p266
    %p268 = pneg %p267
    // Predicated region
    $region9: #{tpu_custom_call.1} parent=5 // pred_check
      _
    $region10: #{tpu_custom_call.1} parent=5 // pred_check_branch
      %270 = sbr.rel (%p267) target = $region12
    $region11: #{tpu_custom_call.1} parent=5 // pred_region
      %s271 = ssub.s32 %s16, 1
      // Predicated region
      $region13: #{tpu_custom_call.1} parent=11 // pred_check
        %p272 = pneg %p63
      $region14: #{tpu_custom_call.1} parent=11 // pred_check_branch
        %274 = sbr.rel (%p272) target = $region16
      $region15: #{tpu_custom_call.1} parent=11 // pred_region
        _
      $region16: #{tpu_custom_call.1} parent=11 // pred_fallthru
        _
      // Predicated region
      $region17: #{tpu_custom_call.1} parent=11 // pred_check
        %p275 = pneg %p84
      $region18: #{tpu_custom_call.1} parent=11 // pred_check_branch
        %277 = sbr.rel (%p275) target = $region20
      $region19: #{tpu_custom_call.1} parent=11 // pred_region
        _
      $region20: #{tpu_custom_call.1} parent=11 // pred_fallthru
        _
      // Predicated region
      $region21: #{tpu_custom_call.1} parent=11 // pred_check
        %p278 = pneg %p105
      $region22: #{tpu_custom_call.1} parent=11 // pred_check_branch
        %280 = sbr.rel (%p278) target = $region24
      $region23: #{tpu_custom_call.1} parent=11 // pred_region
        _
      $region24: #{tpu_custom_call.1} parent=11 // pred_fallthru
        _
      // Predicated region
      $region25: #{tpu_custom_call.1} parent=11 // pred_check
        %p281 = pneg %p126
      $region26: #{tpu_custom_call.1} parent=11 // pred_check_branch
        %283 = sbr.rel (%p281) target = $region28
      $region27: #{tpu_custom_call.1} parent=11 // pred_region
        _
      $region28: #{tpu_custom_call.1} parent=11 // pred_fallthru
        _
      // Predicated region
      $region29: #{tpu_custom_call.1} parent=11 // pred_check
        %p284 = pneg %p147
      $region30: #{tpu_custom_call.1} parent=11 // pred_check_branch
        %286 = sbr.rel (%p284) target = $region32
      $region31: #{tpu_custom_call.1} parent=11 // pred_region
        _
      $region32: #{tpu_custom_call.1} parent=11 // pred_fallthru
        _
      // Predicated region
      $region33: #{tpu_custom_call.1} parent=11 // pred_check
        %p287 = pneg %p168
      $region34: #{tpu_custom_call.1} parent=11 // pred_check_branch
        %289 = sbr.rel (%p287) target = $region36
      $region35: #{tpu_custom_call.1} parent=11 // pred_region
        _
      $region36: #{tpu_custom_call.1} parent=11 // pred_fallthru
        _
      // Predicated region
      $region37: #{tpu_custom_call.1} parent=11 // pred_check
        %p290 = pneg %p189
      $region38: #{tpu_custom_call.1} parent=11 // pred_check_branch
        %292 = sbr.rel (%p290) target = $region40
      $region39: #{tpu_custom_call.1} parent=11 // pred_region
        _
      $region40: #{tpu_custom_call.1} parent=11 // pred_fallthru
        _
      // Predicated region
      $region41: #{tpu_custom_call.1} parent=11 // pred_check
        %p293 = pneg %p210
      $region42: #{tpu_custom_call.1} parent=11 // pred_check_branch
        %295 = sbr.rel (%p293) target = $region44
      $region43: #{tpu_custom_call.1} parent=11 // pred_region
        _
      $region44: #{tpu_custom_call.1} parent=11 // pred_fallthru
        _
      // Predicated region
      $region45: #{tpu_custom_call.1} parent=11 // pred_check
        %p296 = pneg %p231
      $region46: #{tpu_custom_call.1} parent=11 // pred_check_branch
        %298 = sbr.rel (%p296) target = $region48
      $region47: #{tpu_custom_call.1} parent=11 // pred_region
        _
      $region48: #{tpu_custom_call.1} parent=11 // pred_fallthru
        _
    $region12: #{tpu_custom_call.1} parent=5 // pred_fallthru
      _
    %p299 = scmp.lt.s32.totalorder %s16, 2
    // Predicated region
    $region49: #{tpu_custom_call.1} parent=5 // pred_check
      %p300 = pneg %p299
    $region50: #{tpu_custom_call.1} parent=5 // pred_check_branch
      %302 = sbr.rel (%p300) target = $region52
    $region51: #{tpu_custom_call.1} parent=5 // pred_region
      // Predicated region
      $region53: #{tpu_custom_call.1} parent=51 // pred_check
        %p303 = pneg %p36
      $region54: #{tpu_custom_call.1} parent=51 // pred_check_branch
        %305 = sbr.rel (%p303) target = $region56
      $region55: #{tpu_custom_call.1} parent=51 // pred_region
        %p306 = scmp.lt.s32.totalorder %s16, 1
        %s307 = scalar_select %p306, %s16, 1
        %s308 = smul.addr %s307, 2
        %s309 = smul.addr %s308, 4
        %s310 = scalar_lea.vmem %s0, %s309
      $region56: #{tpu_custom_call.1} parent=51 // pred_fallthru
        _
    $region52: #{tpu_custom_call.1} parent=5 // pred_fallthru
      _
    %p311 = scmp.le.s32.totalorder 1, %s16
    %p312 = scmp.lt.s32.totalorder %s16, 3
    %p313 = pnand %p311, %p312
    %p314 = pneg %p313
    // Predicated region
    $region57: #{tpu_custom_call.1} parent=5 // pred_check
      _
    $region58: #{tpu_custom_call.1} parent=5 // pred_check_branch
      %316 = sbr.rel (%p313) target = $region60
    $region59: #{tpu_custom_call.1} parent=5 // pred_region
      %s317 = ssub.s32 %s16, 1
      %p318 = scmp.lt.s32.totalorder %s21, 1
      %s319 = scalar_select %p318, %s21, 1
      %s320 = smul.addr %s319, 2
      %s321 = smul.addr %s320, 4
      %s322 = scalar_lea.vmem %s0, %s321
      %p323 = pneg %p42
      %p324 = pneg %p39
      %p325 = pneg %p63
      %p326 = pneg %p60
      %p327 = pneg %p84
      %p328 = pneg %p81
      %p329 = pneg %p105
      %p330 = pneg %p102
      %p331 = pneg %p126
      %p332 = pneg %p123
      %p333 = pneg %p147
      %p334 = pneg %p144
      %p335 = pneg %p168
      %p336 = pneg %p165
      %p337 = pneg %p189
      %p338 = pneg %p186
      %p339 = pneg %p210
      %p340 = pneg %p207
      %p341 = pneg %p231
      %p342 = pneg %p228
      %p343 = pneg %p257
      %p344 = pneg %p254
      %p345 = scmp.lt.s32.totalorder %s21, 1
      %s346 = scalar_select %p345, %s21, 1
      %s347 = smul.addr %s346, 4
      %s348 = smul.addr %s347, 8
      %s349 = scalar_lea.vmem %s10, %s348
      %p350 = scmp.lt.s32.totalorder %s21, 1
      %s351 = scalar_select %p350, %s21, 1
      %s352 = smul.addr %s351, 2
      %s353 = smul.addr %s352, 4
      %s354 = scalar_lea.vmem %s0, %s353
      %p355 = scmp.lt.s32.totalorder %s21, 1
      %s356 = scalar_select %p355, %s21, 1
      %s357 = smul.addr %s356, 4
      %s358 = smul.addr %s357, 8
      %s359 = scalar_lea.vmem %s10, %s358
      %v363 = vld [vmem:[%s354] sm:$0xff]
      %v365 = vcombine.high %v363, %v363
      %v367 = vpack.c.bf16 %v363, %v363
      %v368 = vpack.c.bf16 %v365, %v365
      %v371 = vunpack.c.l.b16 %v367
      %v372 = vunpack.c.l.b16 %v368
      %v373 = vpack.c.b16 %v372, %v371
      %375 = vst [vmem:[#allocation2] sm:$0x33] %v373
      %v376 = vlaneseq
      %v377 = vand.u32 %v376, 127
      %v378 = vadd.s32 %v377, 128
      %vm379 = vcmp.lt.s32.totalorder %v377, 0
      %v380 = vsub.s32 0, %v377
      %v381 = vsel %vm379, %v380, %v377
      %v382 = vshrl.u32 %v381, 4
      %v383 = vand.u32 %v381, 15
      %v384 = vsub.s32 0, %v383
      %v385 = vsel %vm379, %v384, %v383
      %vm386 = vcmp.lt.s32.totalorder %v378, 0
      %v387 = vsub.s32 0, %v378
      %v388 = vsel %vm386, %v387, %v378
      %v389 = vshrl.u32 %v388, 4
      %v390 = vand.u32 %v388, 15
      %v391 = vsub.s32 0, %v390
      %v392 = vsel %vm386, %v391, %v390
      %vm393 = vcmp.ne.s32.totalorder %v385, 0
      %vm394 = vcmp.ne.s32.totalorder %v392, 0
      %vm395 = vcmp.lt.s32.totalorder %v385, 0
      %vm396 = vcmp.lt.s32.totalorder %v392, 0
      %vm397 = vmand %vm395, %vm393
      %vm398 = vmand %vm396, %vm394
      %v399 = vadd.s32 %v385, 16
      %v400 = vadd.s32 %v392, 16
      %v401 = vsel %vm397, %v399, %v385
      %v402 = vsel %vm398, %v400, %v392
      %vm403 = vcmp.ge.s32.totalorder %v401, 1
      %vm404 = vcmp.ge.s32.totalorder %v402, 1
      %vm405 = vcmp.le.s32.totalorder %v401, 14
      %vm406 = vcmp.le.s32.totalorder %v402, 14
      %v407 = vld [vmem:[#allocation2] sm:$0x33]
      %v408 = vunpack.c.l.bf16 %v407
      %v409 = vunpack.c.h.bf16 %v407
      %v410 = vld [vmem:[%s1] sm:$0xf]
      %412 = vset.pattern.permute.xlu0 0
      %413 = vperm.xlu0 %412, %v410
      %v414 = vpop.permute.xlu0 %413
      %v416 = vmul.f32 %v408, %v414
      %v417 = vmul.f32 %v409, %v414
      %v418 = vld [vmem:[%s2] sm:$0xf]
      %420 = vset.pattern.permute.xlu0 0
      %421 = vperm.xlu0 %420, %v418
      %v422 = vpop.permute.xlu0 %421
      %v424 = vadd.f32 %v416, %v422
      %v425 = vadd.f32 %v417, %v422
      %v426 = vmax.f32 %v424, 0.0
      %v427 = vmax.f32 %v425, 0.0
      %v428 = vpack.c.bf16 %v426, %v426
      %v429 = vpack.c.bf16 %v427, %v427
      %v430 = vsel %vm403, 1, 0
      %v431 = vsel %vm404, 1, 0
      %vm432 = vcmp.eq.s32.totalorder %v430, 1
      %vm433 = vcmp.eq.s32.totalorder %v431, 1
      %vm434 = vmpackc.low %vm433, %vm432
      %v435 = vsel %vm434, 65537, 0
      %v436 = vlaneseq
      %v437 = vshrl.u32 %v436, 7
      %v438 = vsub.s32 0, %v437
      %v439 = vrot.slane %v435, %v438
      %v440 = vlaneseq
      %v441 = vshrl.u32 %v440, 7
      %v442 = vsub.s32 4, %v441
      %v443 = vrot.slane %v435, %v442
      %444 = vrot.lane.b32.xlu0 %v439, 111
      %v445 = vpop.permute.xlu0 %444
      %446 = vrot.lane.b32.xlu0 %v443, 111
      %v447 = vpop.permute.xlu0 %446
      %vm448 = vcmask 908288
      %v449 = vsel %vm448, %v445, %v447
      %vm450 = vcmp.ne.s16.totalorder %v449, 0
      %vm451 = vcmp.ne.s16.totalorder %v447, 0
      %v452 = vsel %vm450, %v428, 0
      %v453 = vsel %vm451, %v429, 0
      %v456 = vunpack.c.l.b16 %v452
      %v457 = vunpack.c.l.b16 %v453
      %v458 = vpack.c.b16 %v457, %v456
      %459 = vrot.lane.b32.xlu0 %v458, 17
      %v460 = vpop.permute.xlu0 %459
      %v461 = vrot.slane %v460, 4
      %vm462 = vcmask 138240
      %v463 = vsel %vm462, %v461, %v460
      %vm465 = vcmask 1041544
      %vm466 = vcmask 1045508
      %vm467 = vmor %vm466, %vm465
      %468 = vst.msk [vmem:[#allocation3] sm:$0x33] %vm467, %v463
      %vm469 = vcmask 132096
      %470 = vst.msk [vmem:[#allocation3] sm:$0x3] %vm469, 0
      %v473 = vunpack.c.l.b16 %v428
      %v474 = vunpack.c.l.b16 %v429
      %v475 = vpack.c.b16 %v474, %v473
      %v476 = vrot.slane %v475, 6
      %477 = vrot.lane.b32.xlu0 %v476, 16
      %v478 = vpop.permute.xlu0 %477
      %v479 = vrot.slane %v478, 4
      %vm480 = vcmask 130048
      %v481 = vsel %vm480, %v479, %v478
      %vm483 = vcmask 1043586
      %vm484 = vcmask 1047558
      %vm485 = vmor %vm484, %vm483
      %486 = vst.msk [vmem:[#allocation3] sm:$0xcc] %vm485, %v481
      %vm487 = vcmask 125954
      %488 = vst.msk [vmem:[#allocation3] sm:$0xc] %vm487, 0
      %v489 = vsel %vm405, 1, 0
      %v490 = vsel %vm406, 1, 0
      %vm491 = vcmp.eq.s32.totalorder %v489, 1
      %vm492 = vcmp.eq.s32.totalorder %v490, 1
      %vm493 = vmpackc.low %vm492, %vm491
      %v494 = vsel %vm493, 65537, 0
      %v495 = vlaneseq
      %v496 = vshrl.u32 %v495, 7
      %v497 = vsub.s32 0, %v496
      %v498 = vrot.slane %v494, %v497
      %v499 = vlaneseq
      %v500 = vshrl.u32 %v499, 7
      %v501 = vsub.s32 4, %v500
      %v502 = vrot.slane %v494, %v501
      %503 = vrot.lane.b32.xlu0 %v498, 113
      %v504 = vpop.permute.xlu0 %503
      %505 = vrot.lane.b32.xlu0 %v502, 113
      %v506 = vpop.permute.xlu0 %505
      %vm507 = vcmask 924672
      %v508 = vsel %vm507, %v504, %v506
      %vm509 = vcmp.ne.s16.totalorder %v508, 0
      %vm510 = vcmp.ne.s16.totalorder %v506, 0
      %v511 = vsel %vm509, %v428, 0
      %v512 = vsel %vm510, %v429, 0
      %v515 = vunpack.c.l.b16 %v511
      %v516 = vunpack.c.l.b16 %v512
      %v517 = vpack.c.b16 %v516, %v515
      %518 = vrot.lane.b32.xlu0 %v517, 15
      %v519 = vpop.permute.xlu0 %518
      %v520 = vrot.slane %v519, 4
      %vm521 = vcmask 121856
      %v522 = vsel %vm521, %v520, %v519
      %vm524 = vcmask 1041528
      %vm525 = vmor %vm466, %vm524
      %526 = vst.msk [vmem:[#allocation3 + $0x8] sm:$0x33] %vm525, %v522
      %vm527 = vcmask 115712
      %528 = vst.msk [vmem:[#allocation3 + $0x8] sm:$0x3] %vm527, 0
      %529 = vrot.lane.b32.xlu0 %v439, 127
      %v530 = vpop.permute.xlu0 %529
      %531 = vrot.lane.b32.xlu0 %v443, 127
      %v532 = vpop.permute.xlu0 %531
      %vm533 = vcmask 1039360
      %v534 = vsel %vm533, %v530, %v532
      %vm535 = vcmp.ne.s16.totalorder %v534, 0
      %vm536 = vcmp.ne.s16.totalorder %v532, 0
      %v537 = vsel %vm535, %v428, 0
      %v538 = vsel %vm536, %v429, 0
      %v541 = vunpack.c.l.b16 %v537
      %v542 = vunpack.c.l.b16 %v538
      %v543 = vpack.c.b16 %v542, %v541
      %v544 = vrot.slane %v543, 6
      %545 = vrot.lane.b32.xlu0 %v544, 1
      %v546 = vpop.permute.xlu0 %545
      %v547 = vrot.slane %v546, 4
      %vm548 = vcmask 7168
      %v549 = vsel %vm548, %v547, %v546
      %vm551 = vcmask 1043466
      %vm552 = vmor %vm484, %vm551
      %553 = vst.msk [vmem:[#allocation3 + $0x8] sm:$0xcc] %vm552, %v549
      %vm554 = vcmask 3074
      %555 = vst.msk [vmem:[#allocation3 + $0x8] sm:$0xc] %vm554, 0
      %557 = vst [vmem:[#allocation3 + $0x10] sm:$0x33] %v475
      %558 = vrot.lane.b32.xlu0 %v498, 1
      %v559 = vpop.permute.xlu0 %558
      %560 = vrot.lane.b32.xlu0 %v502, 1
      %v561 = vpop.permute.xlu0 %560
      %v562 = vsel %vm548, %v559, %v561
      %vm563 = vcmp.ne.s16.totalorder %v559, 0
      %vm564 = vcmp.ne.s16.totalorder %v562, 0
      %v565 = vsel %vm563, %v428, 0
      %v566 = vsel %vm564, %v429, 0
      %v569 = vunpack.c.l.b16 %v565
      %v570 = vunpack.c.l.b16 %v566
      %v571 = vpack.c.b16 %v570, %v569
      %v572 = vrot.slane %v571, 6
      %573 = vrot.lane.b32.xlu0 %v572, 127
      %v574 = vpop.permute.xlu0 %573
      %v575 = vrot.slane %v574, 4
      %v576 = vsel %vm533, %v574, %v575
      %vm578 = vcmask 1043458
      %vm579 = vcmask 1039366
      %vm580 = vmor %vm579, %vm578
      %581 = vst.msk [vmem:[#allocation3 + $0x10] sm:$0xcc] %vm580, %v576
      %vm582 = vcmask 1044474
      %583 = vst.msk [vmem:[#allocation3 + $0x14] sm:$0xc] %vm582, 0
      %584 = vrot.lane.b32.xlu0 %v439, 15
      %v585 = vpop.permute.xlu0 %584
      %586 = vrot.lane.b32.xlu0 %v443, 15
      %v587 = vpop.permute.xlu0 %586
      %v588 = vsel %vm521, %v585, %v587
      %vm589 = vcmp.ne.s16.totalorder %v585, 0
      %vm590 = vcmp.ne.s16.totalorder %v588, 0
      %v591 = vsel %vm589, %v428, 0
      %v592 = vsel %vm590, %v429, 0
      %v595 = vunpack.c.l.b16 %v591
      %v596 = vunpack.c.l.b16 %v592
      %v597 = vpack.c.b16 %v596, %v595
      %598 = vrot.lane.b32.xlu0 %v597, 113
      %v599 = vpop.permute.xlu0 %598
      %v600 = vrot.slane %v599, 4
      %v601 = vsel %vm507, %v599, %v600
      %vm603 = vcmask 1041408
      %vm604 = vcmask 922628
      %vm605 = vmor %vm604, %vm603
      %606 = vst.msk [vmem:[#allocation3 + $0x18] sm:$0x33] %vm605, %v601
      %vm607 = vcmask 1042312
      %608 = vst.msk [vmem:[#allocation3 + $0x1c] sm:$0x3] %vm607, 0
      %609 = vrot.lane.b32.xlu0 %v476, 112
      %v610 = vpop.permute.xlu0 %609
      %v611 = vrot.slane %v610, 4
      %vm612 = vcmask 916480
      %v613 = vsel %vm612, %v610, %v611
      %vm615 = vcmask 916486
      %vm616 = vmor %vm615, %vm578
      %617 = vst.msk [vmem:[#allocation3 + $0x18] sm:$0xcc] %vm616, %v613
      %vm618 = vcmask 1044354
      %619 = vst.msk [vmem:[#allocation3 + $0x1c] sm:$0xc] %vm618, 0
      %620 = vrot.lane.b32.xlu0 %v498, 17
      %v621 = vpop.permute.xlu0 %620
      %622 = vrot.lane.b32.xlu0 %v502, 17
      %v623 = vpop.permute.xlu0 %622
      %v624 = vsel %vm462, %v621, %v623
      %vm625 = vcmp.ne.s16.totalorder %v621, 0
      %vm626 = vcmp.ne.s16.totalorder %v624, 0
      %v627 = vsel %vm625, %v428, 0
      %v628 = vsel %vm626, %v429, 0
      %v631 = vunpack.c.l.b16 %v627
      %v632 = vunpack.c.l.b16 %v628
      %v633 = vpack.c.b16 %v632, %v631
      %634 = vrot.lane.b32.xlu0 %v633, 111
      %v635 = vpop.permute.xlu0 %634
      %v636 = vrot.slane %v635, 4
      %v637 = vsel %vm448, %v635, %v636
      %vm639 = vcmask 906244
      %vm640 = vmor %vm639, %vm603
      %641 = vst.msk [vmem:[#allocation3 + $0x20] sm:$0x33] %vm640, %v637
      %vm642 = vcmask 1042296
      %643 = vst.msk [vmem:[#allocation3 + $0x24] sm:$0x3] %vm642, 0
      %v644 = vld [vmem:[%s3] sm:$0x3]
      %v645 = vld [vmem:[#allocation3] sm:$0xff]
      %v646 = vld [vmem:[#allocation3 + $0x8] sm:$0xff]
      %v647 = vld [vmem:[#allocation3 + $0x10] sm:$0xff]
      %v648 = vld [vmem:[#allocation3 + $0x18] sm:$0xff]
      %v649 = vld [vmem:[#allocation3 + $0x20] sm:$0x33]
      %v655 = vunpack.c.l.b16 %v645
      %v656 = vunpack.c.h.b16 %v645
      %v657 = vunpack.c.l.b16 %v646
      %v658 = vunpack.c.h.b16 %v646
      %v659 = vunpack.c.l.b16 %v647
      %v660 = vunpack.c.h.b16 %v647
      %v661 = vunpack.c.l.b16 %v648
      %v662 = vunpack.c.h.b16 %v648
      %v663 = vunpack.c.l.b16 %v649
      %v664 = vunpack.c.h.b16 %v649
      %v665 = vpack.c.b16 %v657, %v655
      %v666 = vpack.c.b16 %v658, %v656
      %v667 = vpack.c.b16 %v661, %v659
      %v668 = vpack.c.b16 %v662, %v660
      %v669 = vpack.c.b16 %v663, %v663
      %v670 = vpack.c.b16 %v664, %v664
      %vm675 = vcmask 293888
      %v677 = vsel %vm675, %v644, 0
      %v680 = vsel %vm603, %v669, 0
      %v683 = vsel %vm603, %v670, 0
      %685 = vmatprep.subr.bf16.mxu0 0
      %686 = vmatpush1.bf16.msra.mxu0 0
      %687 = vmatprep.subr.bf16.mxu0 0
      %688 = vmatpush1.bf16.msra.mxu0 0
      %689 = vmatprep.subr.bf16.mxu0 0
      %690 = vmatpush1.bf16.msra.mxu0 0
      %691 = vmatprep.subr.bf16.mxu0 0
      %692 = vmatpush1.bf16.msra.mxu0 0
      %693 = vmatprep.subr.bf16.mxu0 0
      %694 = vmatpush1.bf16.msra.mxu0 0
      %695 = vmatprep.subr.bf16.mxu0 %v683
      %696 = vmatpush1.bf16.msra.mxu0 %v680
      %697 = vmatprep.subr.bf16.mxu0 %v668
      %698 = vmatpush1.bf16.msra.mxu0 %v667
      %699 = vmatprep.subr.bf16.mxu0 %v666
      %700 = vmatpush1.bf16.msra.mxu0 %v665
      %701 = vmatprep.subr.bf16.mxu0 0
      %702 = vmatpush2.bf16.msra.mxu0 0
      %703 = vmatprep.subr.bf16.mxu0 0
      %704 = vmatpush2.bf16.msra.mxu0 0
      %705 = vmatprep.subr.bf16.mxu0 0
      %706 = vmatpush2.bf16.msra.mxu0 0
      %707 = vmatprep.subr.bf16.mxu0 0
      %708 = vmatpush2.bf16.msra.mxu0 0
      %709 = vmatprep.subr.bf16.mxu0 0
      %710 = vmatpush2.bf16.msra.mxu0 0
      %711 = vmatprep.subr.bf16.mxu0 0
      %712 = vmatpush2.bf16.msra.mxu0 0
      %713 = vmatprep.subr.bf16.mxu0 0
      %714 = vmatpush2.bf16.msra.mxu0 0
      %715 = vmatprep.subr.bf16.mxu0 0
      %716 = vmatpush2.bf16.msra.mxu0 0
      %717 = vmatprep.mubr.bf16.mxu0 0
      %718 = vmatmul.mubr.bf16.gmra.mxu0 %v677
      %v719 = vpop.f32.mrf.mxu0
      %v720 = vadd.f32 0.0, %v719
      %v721 = vpop.f32.mrf.mxu0
      %v722 = vadd.f32 0.0, %v721
      %v723 = vpop.f32.mrf.mxu0
      %v724 = vpop.f32.mrf.mxu0
      %725 = vdwg.mxu0
      %v726 = vpack.c.bf16 %v720, %v720
      %v727 = vpack.c.bf16 %v722, %v722
      %v730 = vunpack.c.l.b16 %v726
      %v731 = vunpack.c.l.b16 %v727
      %v732 = vpack.c.b16 %v731, %v730
      %v733 = vrot.slane %v732, 6
      %735 = vst [vmem:[#allocation2] sm:$0xcc] %v733
      %736 = vst [vmem:[%s359] sm:$0xf] %v720
      %737 = vst [vmem:[%s359 + $0x8] sm:$0xf] %v722
      %v738 = vld [vmem:[#allocation2] sm:$0xff]
      %v739 = vunpack.c.l.bf16 %v738
      %v740 = vunpack.c.h.bf16 %v738
      %v741 = vld [vmem:[%s4] sm:$0xff]
      %743 = vset.pattern.permute.xlu0 0
      %744 = vperm.xlu0 %743, %v741
      %v745 = vpop.permute.xlu0 %744
      %v747 = vmul.f32 %v739, %v745
      %v748 = vmul.f32 %v740, %v745
      %v749 = vld [vmem:[%s5] sm:$0xff]
      %751 = vset.pattern.permute.xlu0 0
      %752 = vperm.xlu0 %751, %v749
      %v753 = vpop.permute.xlu0 %752
      %v755 = vadd.f32 %v747, %v753
      %v756 = vadd.f32 %v748, %v753
      %v757 = vmax.f32 %v755, 0.0
      %v758 = vmax.f32 %v756, 0.0
      %v759 = vpack.c.bf16 %v757, %v757
      %v760 = vpack.c.bf16 %v758, %v758
      %v761 = vsel %vm450, %v759, 0
      %v762 = vsel %vm451, %v760, 0
      %v765 = vunpack.c.l.b16 %v761
      %v766 = vunpack.c.l.b16 %v762
      %v767 = vpack.c.b16 %v766, %v765
      %768 = vrot.lane.b32.xlu0 %v767, 17
      %v769 = vpop.permute.xlu0 %768
      %v770 = vrot.slane %v769, 4
      %v771 = vsel %vm462, %v770, %v769
      %vm773 = vcmask 1043592
      %vm774 = vcmask 1047556
      %vm775 = vmor %vm774, %vm773
      %776 = vst.msk [vmem:[#allocation3] sm:$0xff] %vm775, %v771
      %vm777 = vcmask 134144
      %778 = vst.msk [vmem:[#allocation3] sm:$0xf] %vm777, 0
      %v781 = vunpack.c.l.b16 %v759
      %v782 = vunpack.c.l.b16 %v760
      %v783 = vpack.c.b16 %v782, %v781
      %784 = vrot.lane.b32.xlu0 %v783, 16
      %v785 = vpop.permute.xlu0 %784
      %v786 = vrot.slane %v785, 4
      %v787 = vsel %vm480, %v786, %v785
      %vm789 = vcmask 1043584
      %vm790 = vmor %vm774, %vm789
      %791 = vst.msk [vmem:[#allocation3 + $0x8] sm:$0xff] %vm790, %v787
      %vm792 = vcmask 125952
      %793 = vst.msk [vmem:[#allocation3 + $0x8] sm:$0xf] %vm792, 0
      %v794 = vsel %vm509, %v759, 0
      %v795 = vsel %vm510, %v760, 0
      %v798 = vunpack.c.l.b16 %v794
      %v799 = vunpack.c.l.b16 %v795
      %v800 = vpack.c.b16 %v799, %v798
      %801 = vrot.lane.b32.xlu0 %v800, 15
      %v802 = vpop.permute.xlu0 %801
      %v803 = vrot.slane %v802, 4
      %v804 = vsel %vm521, %v803, %v802
      %vm806 = vcmask 1043576
      %vm807 = vmor %vm774, %vm806
      %808 = vst.msk [vmem:[#allocation3 + $0x10] sm:$0xff] %vm807, %v804
      %vm809 = vcmask 117760
      %810 = vst.msk [vmem:[#allocation3 + $0x10] sm:$0xf] %vm809, 0
      %v811 = vsel %vm535, %v759, 0
      %v812 = vsel %vm536, %v760, 0
      %v815 = vunpack.c.l.b16 %v811
      %v816 = vunpack.c.l.b16 %v812
      %v817 = vpack.c.b16 %v816, %v815
      %818 = vrot.lane.b32.xlu0 %v817, 1
      %v819 = vpop.permute.xlu0 %818
      %v820 = vrot.slane %v819, 4
      %v821 = vsel %vm548, %v820, %v819
      %vm823 = vcmask 1043464
      %vm824 = vmor %vm774, %vm823
      %825 = vst.msk [vmem:[#allocation3 + $0x18] sm:$0xff] %vm824, %v821
      %vm826 = vcmask 3072
      %827 = vst.msk [vmem:[#allocation3 + $0x18] sm:$0xf] %vm826, 0
      %829 = vst [vmem:[#allocation3 + $0x20] sm:$0xff] %v783
      %v830 = vsel %vm563, %v759, 0
      %v831 = vsel %vm564, %v760, 0
      %v834 = vunpack.c.l.b16 %v830
      %v835 = vunpack.c.l.b16 %v831
      %v836 = vpack.c.b16 %v835, %v834
      %837 = vrot.lane.b32.xlu0 %v836, 127
      %v838 = vpop.permute.xlu0 %837
      %v839 = vrot.slane %v838, 4
      %v840 = vsel %vm533, %v838, %v839
      %vm842 = vcmask 1043456
      %vm843 = vcmask 1039364
      %vm844 = vmor %vm843, %vm842
      %845 = vst.msk [vmem:[#allocation3 + $0x28] sm:$0xff] %vm844, %v840
      %vm846 = vcmask 1044472
      %847 = vst.msk [vmem:[#allocation3 + $0x2c] sm:$0xf] %vm846, 0
      %v848 = vsel %vm589, %v759, 0
      %v849 = vsel %vm590, %v760, 0
      %v852 = vunpack.c.l.b16 %v848
      %v853 = vunpack.c.l.b16 %v849
      %v854 = vpack.c.b16 %v853, %v852
      %855 = vrot.lane.b32.xlu0 %v854, 113
      %v856 = vpop.permute.xlu0 %855
      %v857 = vrot.slane %v856, 4
      %v858 = vsel %vm507, %v856, %v857
      %vm860 = vcmask 924676
      %vm861 = vmor %vm860, %vm842
      %862 = vst.msk [vmem:[#allocation3 + $0x30] sm:$0xff] %vm861, %v858
      %vm863 = vcmask 1044360
      %864 = vst.msk [vmem:[#allocation3 + $0x34] sm:$0xf] %vm863, 0
      %865 = vrot.lane.b32.xlu0 %v783, 112
      %v866 = vpop.permute.xlu0 %865
      %v867 = vrot.slane %v866, 4
      %v868 = vsel %vm612, %v866, %v867
      %vm870 = vcmask 916484
      %vm871 = vmor %vm870, %vm842
      %872 = vst.msk [vmem:[#allocation3 + $0x38] sm:$0xff] %vm871, %v868
      %vm873 = vcmask 1044352
      %874 = vst.msk [vmem:[#allocation3 + $0x3c] sm:$0xf] %vm873, 0
      %v875 = vsel %vm625, %v759, 0
      %v876 = vsel %vm626, %v760, 0
      %v879 = vunpack.c.l.b16 %v875
      %v880 = vunpack.c.l.b16 %v876
      %v881 = vpack.c.b16 %v880, %v879
      %882 = vrot.lane.b32.xlu0 %v881, 111
      %v883 = vpop.permute.xlu0 %882
      %v884 = vrot.slane %v883, 4
      %v885 = vsel %vm448, %v883, %v884
      %vm887 = vcmask 908292
      %vm888 = vmor %vm887, %vm842
      %889 = vst.msk [vmem:[#allocation3 + $0x40] sm:$0xff] %vm888, %v885
      %vm890 = vcmask 1044344
      %891 = vst.msk [vmem:[#allocation3 + $0x44] sm:$0xf] %vm890, 0
      %v892 = vld [vmem:[%s6] sm:$0x3]
      %v893 = vld [vmem:[#allocation3] sm:$0xff]
      %v894 = vld [vmem:[#allocation3 + $0x8] sm:$0xff]
      %v895 = vld [vmem:[#allocation3 + $0x10] sm:$0xff]
      %v896 = vld [vmem:[#allocation3 + $0x18] sm:$0xff]
      %v897 = vld [vmem:[#allocation3 + $0x20] sm:$0xff]
      %v898 = vld [vmem:[#allocation3 + $0x28] sm:$0xff]
      %v899 = vld [vmem:[#allocation3 + $0x30] sm:$0xff]
      %v900 = vld [vmem:[#allocation3 + $0x38] sm:$0xff]
      %v901 = vld [vmem:[#allocation3 + $0x40] sm:$0xff]
      %v911 = vunpack.c.l.b16 %v893
      %v912 = vunpack.c.h.b16 %v893
      %v913 = vunpack.c.l.b16 %v894
      %v914 = vunpack.c.h.b16 %v894
      %v915 = vunpack.c.l.b16 %v895
      %v916 = vunpack.c.h.b16 %v895
      %v917 = vunpack.c.l.b16 %v896
      %v918 = vunpack.c.h.b16 %v896
      %v919 = vunpack.c.l.b16 %v897
      %v920 = vunpack.c.h.b16 %v897
      %v921 = vunpack.c.l.b16 %v898
      %v922 = vunpack.c.h.b16 %v898
      %v923 = vunpack.c.l.b16 %v899
      %v924 = vunpack.c.h.b16 %v899
      %v925 = vunpack.c.l.b16 %v900
      %v926 = vunpack.c.h.b16 %v900
      %v927 = vunpack.c.l.b16 %v901
      %v928 = vunpack.c.h.b16 %v901
      %v929 = vpack.c.b16 %v913, %v911
      %v930 = vpack.c.b16 %v914, %v912
      %v931 = vpack.c.b16 %v917, %v915
      %v932 = vpack.c.b16 %v918, %v916
      %v933 = vpack.c.b16 %v921, %v919
      %v934 = vpack.c.b16 %v922, %v920
      %v935 = vpack.c.b16 %v925, %v923
      %v936 = vpack.c.b16 %v926, %v924
      %v937 = vpack.c.b16 %v927, %v927
      %v938 = vpack.c.b16 %v928, %v928
      %vm947 = vcmask 588800
      %v949 = vsel %vm947, %v892, 0
      %v952 = vsel %vm842, %v937, 0
      %v955 = vsel %vm842, %v938, 0
      %957 = vmatprep.subr.bf16.mxu0 0
      %958 = vmatpush1.bf16.msra.mxu0 0
      %959 = vmatprep.subr.bf16.mxu0 0
      %960 = vmatpush1.bf16.msra.mxu0 0
      %961 = vmatprep.subr.bf16.mxu0 0
      %962 = vmatpush1.bf16.msra.mxu0 0
      %963 = vmatprep.subr.bf16.mxu0 %v955
      %964 = vmatpush1.bf16.msra.mxu0 %v952
      %965 = vmatprep.subr.bf16.mxu0 %v936
      %966 = vmatpush1.bf16.msra.mxu0 %v935
      %967 = vmatprep.subr.bf16.mxu0 %v934
      %968 = vmatpush1.bf16.msra.mxu0 %v933
      %969 = vmatprep.subr.bf16.mxu0 %v932
      %970 = vmatpush1.bf16.msra.mxu0 %v931
      %971 = vmatprep.subr.bf16.mxu0 %v930
      %972 = vmatpush1.bf16.msra.mxu0 %v929
      %973 = vmatprep.subr.bf16.mxu0 0
      %974 = vmatpush2.bf16.msra.mxu0 0
      %975 = vmatprep.subr.bf16.mxu0 0
      %976 = vmatpush2.bf16.msra.mxu0 0
      %977 = vmatprep.subr.bf16.mxu0 0
      %978 = vmatpush2.bf16.msra.mxu0 0
      %979 = vmatprep.subr.bf16.mxu0 0
      %980 = vmatpush2.bf16.msra.mxu0 0
      %981 = vmatprep.subr.bf16.mxu0 0
      %982 = vmatpush2.bf16.msra.mxu0 0
      %983 = vmatprep.subr.bf16.mxu0 0
      %984 = vmatpush2.bf16.msra.mxu0 0
      %985 = vmatprep.subr.bf16.mxu0 0
      %986 = vmatpush2.bf16.msra.mxu0 0
      %987 = vmatprep.subr.bf16.mxu0 0
      %988 = vmatpush2.bf16.msra.mxu0 0
      %989 = vmatprep.mubr.bf16.mxu0 0
      %990 = vmatmul.mubr.bf16.gmra.mxu0 %v949
      %v991 = vpop.f32.mrf.mxu0
      %v992 = vadd.f32 0.0, %v991
      %v993 = vpop.f32.mrf.mxu0
      %v994 = vadd.f32 0.0, %v993
      %v995 = vpop.f32.mrf.mxu0
      %v996 = vpop.f32.mrf.mxu0
      %997 = vdwg.mxu0
      %v998 = vpack.c.bf16 %v992, %v992
      %v999 = vpack.c.bf16 %v994, %v994
      %v1002 = vunpack.c.l.b16 %v998
      %v1003 = vunpack.c.l.b16 %v999
      %v1004 = vpack.c.b16 %v1003, %v1002
      %1006 = vst [vmem:[#allocation2 + $0x8] sm:$0x33] %v1004
      %v1009 = vrot.slane %v992, 4
      %v1010 = vrot.slane %v994, 4
      %1013 = vst [vmem:[%s359] sm:$0xf0] %v1009
      %1014 = vst [vmem:[%s359 + $0x8] sm:$0xf0] %v1010
      %v1015 = vld [vmem:[#allocation2] sm:$0xff]
      %v1016 = vld [vmem:[#allocation2 + $0x8] sm:$0x33]
      %v1017 = vunpack.c.l.bf16 %v1015
      %v1018 = vunpack.c.h.bf16 %v1015
      %v1019 = vunpack.c.l.bf16 %v1016
      %v1020 = vunpack.c.h.bf16 %v1016
      %v1021 = vld [vmem:[%s7] sm:$0xff]
      %v1022 = vld [vmem:[%s7 + $0x8] sm:$0xf]
      %1024 = vset.pattern.permute.xlu0 0
      %1025 = vperm.xlu0 %1024, %v1021
      %v1026 = vpop.permute.xlu0 %1025
      %1029 = vset.pattern.permute.xlu0 0
      %1030 = vperm.xlu0 %1029, %v1022
      %v1031 = vpop.permute.xlu0 %1030
      %v1033 = vmul.f32 %v1017, %v1026
      %v1034 = vmul.f32 %v1018, %v1026
      %v1035 = vmul.f32 %v1019, %v1031
      %v1036 = vmul.f32 %v1020, %v1031
      %v1037 = vld [vmem:[%s8] sm:$0xff]
      %v1038 = vld [vmem:[%s8 + $0x8] sm:$0xf]
      %1040 = vset.pattern.permute.xlu0 0
      %1041 = vperm.xlu0 %1040, %v1037
      %v1042 = vpop.permute.xlu0 %1041
      %1045 = vset.pattern.permute.xlu0 0
      %1046 = vperm.xlu0 %1045, %v1038
      %v1047 = vpop.permute.xlu0 %1046
      %v1049 = vadd.f32 %v1033, %v1042
      %v1050 = vadd.f32 %v1034, %v1042
      %v1051 = vadd.f32 %v1035, %v1047
      %v1052 = vadd.f32 %v1036, %v1047
      %v1053 = vmax.f32 %v1049, 0.0
      %v1054 = vmax.f32 %v1050, 0.0
      %v1055 = vmax.f32 %v1051, 0.0
      %v1056 = vmax.f32 %v1052, 0.0
      %v1057 = vpack.c.bf16 %v1055, %v1053
      %v1058 = vpack.c.bf16 %v1056, %v1054
      %v1059 = vsel %vm450, %v1057, 0
      %v1060 = vsel %vm451, %v1058, 0
      %v1063 = vunpack.c.l.b16 %v1059
      %v1064 = vunpack.c.l.b16 %v1060
      %v1065 = vunpack.c.h.b16 %v1059
      %v1066 = vunpack.c.h.b16 %v1060
      %v1067 = vpack.c.b16 %v1064, %v1063
      %v1068 = vpack.c.b16 %v1066, %v1065
      %1069 = vrot.lane.b32.xlu0 %v1067, 17
      %v1070 = vpop.permute.xlu0 %1069
      %1071 = vrot.lane.b32.xlu0 %v1068, 17
      %v1072 = vpop.permute.xlu0 %1071
      %v1073 = vrot.slane %v1070, 4
      %v1074 = vrot.slane %v1072, 4
      %v1075 = vsel %vm462, %v1073, %v1070
      %v1076 = vsel %vm462, %v1074, %v1072
      %1079 = vst.msk [vmem:[#allocation3] sm:$0xff] %vm775, %v1075
      %1080 = vst.msk [vmem:[#allocation3 + $0x8] sm:$0x33] %vm467, %v1076
      %1081 = vst.msk [vmem:[#allocation3] sm:$0xf] %vm777, 0
      %1082 = vst.msk [vmem:[#allocation3 + $0x8] sm:$0x3] %vm469, 0
      %v1085 = vunpack.c.l.b16 %v1057
      %v1086 = vunpack.c.l.b16 %v1058
      %v1087 = vunpack.c.h.b16 %v1057
      %v1088 = vunpack.c.h.b16 %v1058
      %v1089 = vpack.c.b16 %v1086, %v1085
      %v1090 = vpack.c.b16 %v1088, %v1087
      %vm1091 = vcmask 1041408
      %vm1092 = vcmask 1045508
      %vm1093 = vmor %vm1091, %vm1092
      %v1094 = vrot.slane %v1089, 6
      %v1095 = vrot.slane %v1094, 4
      %v1096 = vrot.slane %v1090, 6
      %v1097 = vsel %vm1093, %v1095, %v1096
      %1098 = vrot.lane.b32.xlu0 %v1094, 16
      %v1099 = vpop.permute.xlu0 %1098
      %1100 = vrot.lane.b32.xlu0 %v1097, 16
      %v1101 = vpop.permute.xlu0 %1100
      %v1102 = vrot.slane %v1099, 4
      %v1103 = vrot.slane %v1101, 4
      %v1104 = vsel %vm480, %v1102, %v1099
      %v1105 = vsel %vm480, %v1103, %v1101
      %1108 = vst.msk [vmem:[#allocation3 + $0x8] sm:$0xcc] %vm485, %v1104
      %1109 = vst.msk [vmem:[#allocation3 + $0x10] sm:$0xff] %vm790, %v1105
      %1110 = vst.msk [vmem:[#allocation3 + $0x8] sm:$0xc] %vm487, 0
      %1111 = vst.msk [vmem:[#allocation3 + $0x10] sm:$0xf] %vm792, 0
      %v1112 = vsel %vm509, %v1057, 0
      %v1113 = vsel %vm510, %v1058, 0
      %v1116 = vunpack.c.l.b16 %v1112
      %v1117 = vunpack.c.l.b16 %v1113
      %v1118 = vunpack.c.h.b16 %v1112
      %v1119 = vunpack.c.h.b16 %v1113
      %v1120 = vpack.c.b16 %v1117, %v1116
      %v1121 = vpack.c.b16 %v1119, %v1118
      %1122 = vrot.lane.b32.xlu0 %v1120, 15
      %v1123 = vpop.permute.xlu0 %1122
      %1124 = vrot.lane.b32.xlu0 %v1121, 15
      %v1125 = vpop.permute.xlu0 %1124
      %v1126 = vrot.slane %v1123, 4
      %v1127 = vrot.slane %v1125, 4
      %v1128 = vsel %vm521, %v1126, %v1123
      %v1129 = vsel %vm521, %v1127, %v1125
      %1132 = vst.msk [vmem:[#allocation3 + $0x18] sm:$0xff] %vm807, %v1128
      %1133 = vst.msk [vmem:[#allocation3 + $0x20] sm:$0x33] %vm525, %v1129
      %1134 = vst.msk [vmem:[#allocation3 + $0x18] sm:$0xf] %vm809, 0
      %1135 = vst.msk [vmem:[#allocation3 + $0x20] sm:$0x3] %vm527, 0
      %v1136 = vsel %vm535, %v1057, 0
      %v1137 = vsel %vm536, %v1058, 0
      %v1140 = vunpack.c.l.b16 %v1136
      %v1141 = vunpack.c.l.b16 %v1137
      %v1142 = vunpack.c.h.b16 %v1136
      %v1143 = vunpack.c.h.b16 %v1137
      %v1144 = vpack.c.b16 %v1141, %v1140
      %v1145 = vpack.c.b16 %v1143, %v1142
      %v1146 = vrot.slane %v1144, 6
      %v1147 = vrot.slane %v1146, 4
      %v1148 = vrot.slane %v1145, 6
      %v1149 = vsel %vm1093, %v1147, %v1148
      %1150 = vrot.lane.b32.xlu0 %v1146, 1
      %v1151 = vpop.permute.xlu0 %1150
      %1152 = vrot.lane.b32.xlu0 %v1149, 1
      %v1153 = vpop.permute.xlu0 %1152
      %v1154 = vrot.slane %v1151, 4
      %v1155 = vrot.slane %v1153, 4
      %v1156 = vsel %vm548, %v1154, %v1151
      %v1157 = vsel %vm548, %v1155, %v1153
      %1160 = vst.msk [vmem:[#allocation3 + $0x20] sm:$0xcc] %vm552, %v1156
      %1161 = vst.msk [vmem:[#allocation3 + $0x28] sm:$0xff] %vm824, %v1157
      %1162 = vst.msk [vmem:[#allocation3 + $0x20] sm:$0xc] %vm554, 0
      %1163 = vst.msk [vmem:[#allocation3 + $0x28] sm:$0xf] %vm826, 0
      %1166 = vst [vmem:[#allocation3 + $0x30] sm:$0xff] %v1089
      %1167 = vst [vmem:[#allocation3 + $0x38] sm:$0x33] %v1090
      %v1168 = vsel %vm563, %v1057, 0
      %v1169 = vsel %vm564, %v1058, 0
      %v1172 = vunpack.c.l.b16 %v1168
      %v1173 = vunpack.c.l.b16 %v1169
      %v1174 = vunpack.c.h.b16 %v1168
      %v1175 = vunpack.c.h.b16 %v1169
      %v1176 = vpack.c.b16 %v1173, %v1172
      %v1177 = vpack.c.b16 %v1175, %v1174
      %v1178 = vrot.slane %v1176, 6
      %v1179 = vrot.slane %v1178, 4
      %v1180 = vrot.slane %v1177, 6
      %v1181 = vsel %vm1093, %v1179, %v1180
      %1182 = vrot.lane.b32.xlu0 %v1178, 127
      %v1183 = vpop.permute.xlu0 %1182
      %1184 = vrot.lane.b32.xlu0 %v1181, 127
      %v1185 = vpop.permute.xlu0 %1184
      %v1186 = vrot.slane %v1183, 4
      %v1187 = vrot.slane %v1185, 4
      %v1188 = vsel %vm533, %v1183, %v1186
      %v1189 = vsel %vm533, %v1185, %v1187
      %1192 = vst.msk [vmem:[#allocation3 + $0x38] sm:$0xcc] %vm580, %v1188
      %1193 = vst.msk [vmem:[#allocation3 + $0x40] sm:$0xff] %vm844, %v1189
      %1194 = vst.msk [vmem:[#allocation3 + $0x3c] sm:$0xc] %vm582, 0
      %1195 = vst.msk [vmem:[#allocation3 + $0x44] sm:$0xf] %vm846, 0
      %v1196 = vsel %vm589, %v1057, 0
      %v1197 = vsel %vm590, %v1058, 0
      %v1200 = vunpack.c.l.b16 %v1196
      %v1201 = vunpack.c.l.b16 %v1197
      %v1202 = vunpack.c.h.b16 %v1196
      %v1203 = vunpack.c.h.b16 %v1197
      %v1204 = vpack.c.b16 %v1201, %v1200
      %v1205 = vpack.c.b16 %v1203, %v1202
      %1206 = vrot.lane.b32.xlu0 %v1204, 113
      %v1207 = vpop.permute.xlu0 %1206
      %1208 = vrot.lane.b32.xlu0 %v1205, 113
      %v1209 = vpop.permute.xlu0 %1208
      %v1210 = vrot.slane %v1207, 4
      %v1211 = vrot.slane %v1209, 4
      %v1212 = vsel %vm507, %v1207, %v1210
      %v1213 = vsel %vm507, %v1209, %v1211
      %1216 = vst.msk [vmem:[#allocation3 + $0x48] sm:$0xff] %vm861, %v1212
      %1217 = vst.msk [vmem:[#allocation3 + $0x50] sm:$0x33] %vm605, %v1213
      %1218 = vst.msk [vmem:[#allocation3 + $0x4c] sm:$0xf] %vm863, 0
      %1219 = vst.msk [vmem:[#allocation3 + $0x54] sm:$0x3] %vm607, 0
      %1220 = vrot.lane.b32.xlu0 %v1094, 112
      %v1221 = vpop.permute.xlu0 %1220
      %1222 = vrot.lane.b32.xlu0 %v1097, 112
      %v1223 = vpop.permute.xlu0 %1222
      %v1224 = vrot.slane %v1221, 4
      %v1225 = vrot.slane %v1223, 4
      %v1226 = vsel %vm612, %v1221, %v1224
      %v1227 = vsel %vm612, %v1223, %v1225
      %1230 = vst.msk [vmem:[#allocation3 + $0x50] sm:$0xcc] %vm616, %v1226
      %1231 = vst.msk [vmem:[#allocation3 + $0x58] sm:$0xff] %vm871, %v1227
      %1232 = vst.msk [vmem:[#allocation3 + $0x54] sm:$0xc] %vm618, 0
      %1233 = vst.msk [vmem:[#allocation3 + $0x5c] sm:$0xf] %vm873, 0
      %v1234 = vsel %vm625, %v1057, 0
      %v1235 = vsel %vm626, %v1058, 0
      %v1238 = vunpack.c.l.b16 %v1234
      %v1239 = vunpack.c.l.b16 %v1235
      %v1240 = vunpack.c.h.b16 %v1234
      %v1241 = vunpack.c.h.b16 %v1235
      %v1242 = vpack.c.b16 %v1239, %v1238
      %v1243 = vpack.c.b16 %v1241, %v1240
      %1244 = vrot.lane.b32.xlu0 %v1242, 111
      %v1245 = vpop.permute.xlu0 %1244
      %1246 = vrot.lane.b32.xlu0 %v1243, 111
      %v1247 = vpop.permute.xlu0 %1246
      %v1248 = vrot.slane %v1245, 4
      %v1249 = vrot.slane %v1247, 4
      %v1250 = vsel %vm448, %v1245, %v1248
      %v1251 = vsel %vm448, %v1247, %v1249
      %1254 = vst.msk [vmem:[#allocation3 + $0x60] sm:$0xff] %vm888, %v1250
      %1255 = vst.msk [vmem:[#allocation3 + $0x68] sm:$0x33] %vm640, %v1251
      %1256 = vst.msk [vmem:[#allocation3 + $0x64] sm:$0xf] %vm890, 0
      %1257 = vst.msk [vmem:[#allocation3 + $0x6c] sm:$0x3] %vm642, 0
      %v1258 = vld [vmem:[%s9] sm:$0x3]
      %v1259 = vld [vmem:[#allocation3] sm:$0xff]
      %v1260 = vld [vmem:[#allocation3 + $0x8] sm:$0xff]
      %v1261 = vld [vmem:[#allocation3 + $0x10] sm:$0xff]
      %v1262 = vld [vmem:[#allocation3 + $0x18] sm:$0xff]
      %v1263 = vld [vmem:[#allocation3 + $0x20] sm:$0xff]
      %v1264 = vld [vmem:[#allocation3 + $0x28] sm:$0xff]
      %v1265 = vld [vmem:[#allocation3 + $0x30] sm:$0xff]
      %v1266 = vld [vmem:[#allocation3 + $0x38] sm:$0xff]
      %v1267 = vld [vmem:[#allocation3 + $0x40] sm:$0xff]
      %v1268 = vld [vmem:[#allocation3 + $0x48] sm:$0xff]
      %v1269 = vld [vmem:[#allocation3 + $0x50] sm:$0xff]
      %v1270 = vld [vmem:[#allocation3 + $0x58] sm:$0xff]
      %v1271 = vld [vmem:[#allocation3 + $0x60] sm:$0xff]
      %v1272 = vld [vmem:[#allocation3 + $0x68] sm:$0x33]
      %v1287 = vunpack.c.l.b16 %v1259
      %v1288 = vunpack.c.h.b16 %v1259
      %v1289 = vunpack.c.l.b16 %v1260
      %v1290 = vunpack.c.h.b16 %v1260
      %v1291 = vunpack.c.l.b16 %v1261
      %v1292 = vunpack.c.h.b16 %v1261
      %v1293 = vunpack.c.l.b16 %v1262
      %v1294 = vunpack.c.h.b16 %v1262
      %v1295 = vunpack.c.l.b16 %v1263
      %v1296 = vunpack.c.h.b16 %v1263
      %v1297 = vunpack.c.l.b16 %v1264
      %v1298 = vunpack.c.h.b16 %v1264
      %v1299 = vunpack.c.l.b16 %v1265
      %v1300 = vunpack.c.h.b16 %v1265
      %v1301 = vunpack.c.l.b16 %v1266
      %v1302 = vunpack.c.h.b16 %v1266
      %v1303 = vunpack.c.l.b16 %v1267
      %v1304 = vunpack.c.h.b16 %v1267
      %v1305 = vunpack.c.l.b16 %v1268
      %v1306 = vunpack.c.h.b16 %v1268
      %v1307 = vunpack.c.l.b16 %v1269
      %v1308 = vunpack.c.h.b16 %v1269
      %v1309 = vunpack.c.l.b16 %v1270
      %v1310 = vunpack.c.h.b16 %v1270
      %v1311 = vunpack.c.l.b16 %v1271
      %v1312 = vunpack.c.h.b16 %v1271
      %v1313 = vunpack.c.l.b16 %v1272
      %v1314 = vunpack.c.h.b16 %v1272
      %v1315 = vpack.c.b16 %v1289, %v1287
      %v1316 = vpack.c.b16 %v1290, %v1288
      %v1317 = vpack.c.b16 %v1293, %v1291
      %v1318 = vpack.c.b16 %v1294, %v1292
      %v1319 = vpack.c.b16 %v1297, %v1295
      %v1320 = vpack.c.b16 %v1298, %v1296
      %v1321 = vpack.c.b16 %v1301, %v1299
      %v1322 = vpack.c.b16 %v1302, %v1300
      %v1323 = vpack.c.b16 %v1305, %v1303
      %v1324 = vpack.c.b16 %v1306, %v1304
      %v1325 = vpack.c.b16 %v1309, %v1307
      %v1326 = vpack.c.b16 %v1310, %v1308
      %v1327 = vpack.c.b16 %v1313, %v1311
      %v1328 = vpack.c.b16 %v1314, %v1312
      %vm1341 = vcmask 883712
      %v1343 = vsel %vm1341, %v1258, 0
      %vm1345 = vcmask 1045504
      %v1347 = vsel %vm1345, %v1327, 0
      %v1350 = vsel %vm1345, %v1328, 0
      %1352 = vmatprep.subr.bf16.mxu0 0
      %1353 = vmatpush1.bf16.msra.mxu0 0
      %1354 = vmatprep.subr.bf16.mxu0 %v1350
      %1355 = vmatpush1.bf16.msra.mxu0 %v1347
      %1356 = vmatprep.subr.bf16.mxu0 %v1326
      %1357 = vmatpush1.bf16.msra.mxu0 %v1325
      %1358 = vmatprep.subr.bf16.mxu0 %v1324
      %1359 = vmatpush1.bf16.msra.mxu0 %v1323
      %1360 = vmatprep.subr.bf16.mxu0 %v1322
      %1361 = vmatpush1.bf16.msra.mxu0 %v1321
      %1362 = vmatprep.subr.bf16.mxu0 %v1320
      %1363 = vmatpush1.bf16.msra.mxu0 %v1319
      %1364 = vmatprep.subr.bf16.mxu0 %v1318
      %1365 = vmatpush1.bf16.msra.mxu0 %v1317
      %1366 = vmatprep.subr.bf16.mxu0 %v1316
      %1367 = vmatpush1.bf16.msra.mxu0 %v1315
      %1368 = vmatprep.subr.bf16.mxu0 0
      %1369 = vmatpush2.bf16.msra.mxu0 0
      %1370 = vmatprep.subr.bf16.mxu0 0
      %1371 = vmatpush2.bf16.msra.mxu0 0
      %1372 = vmatprep.subr.bf16.mxu0 0
      %1373 = vmatpush2.bf16.msra.mxu0 0
      %1374 = vmatprep.subr.bf16.mxu0 0
      %1375 = vmatpush2.bf16.msra.mxu0 0
      %1376 = vmatprep.subr.bf16.mxu0 0
      %1377 = vmatpush2.bf16.msra.mxu0 0
      %1378 = vmatprep.subr.bf16.mxu0 0
      %1379 = vmatpush2.bf16.msra.mxu0 0
      %1380 = vmatprep.subr.bf16.mxu0 0
      %1381 = vmatpush2.bf16.msra.mxu0 0
      %1382 = vmatprep.subr.bf16.mxu0 0
      %1383 = vmatpush2.bf16.msra.mxu0 0
      %1384 = vmatprep.mubr.bf16.mxu0 0
      %1385 = vmatmul.mubr.bf16.gmra.mxu0 %v1343
      %v1386 = vpop.f32.mrf.mxu0
      %v1387 = vadd.f32 0.0, %v1386
      %v1388 = vpop.f32.mrf.mxu0
      %v1389 = vadd.f32 0.0, %v1388
      %v1390 = vpop.f32.mrf.mxu0
      %v1391 = vpop.f32.mrf.mxu0
      %1392 = vdwg.mxu0
      %v1393 = vpack.c.bf16 %v1387, %v1387
      %v1394 = vpack.c.bf16 %v1389, %v1389
      %v1397 = vunpack.c.l.b16 %v1393
      %v1398 = vunpack.c.l.b16 %v1394
      %v1399 = vpack.c.b16 %v1398, %v1397
      %v1400 = vrot.slane %v1399, 6
      %1402 = vst [vmem:[#allocation2 + $0x8] sm:$0xcc] %v1400
      %1403 = vst [vmem:[%s359 + $0x10] sm:$0xf] %v1387
      %1404 = vst [vmem:[%s359 + $0x18] sm:$0xf] %v1389
      %p1405 = scmp.lt.s32.totalorder %s21, 1
      %s1406 = scalar_select %p1405, %s21, 1
      %s1407 = smul.addr %s1406, 4
      %s1408 = smul.addr %s1407, 8
      %s1409 = scalar_lea.vmem %s10, %s1408
      // Predicated region
      $region61: #{tpu_custom_call.1} parent=59 // pred_check
        %p1410 = pneg %p254
      $region62: #{tpu_custom_call.1} parent=59 // pred_check_branch
        %1412 = sbr.rel (%p1410) target = $region64
      $region63: #{tpu_custom_call.1} parent=59 // pred_region
        _
      $region64: #{tpu_custom_call.1} parent=59 // pred_fallthru
        _
    $region60: #{tpu_custom_call.1} parent=5 // pred_fallthru
      _
    %p1413 = scmp.le.s32.totalorder 2, %s16
    // Predicated region
    $region65: #{tpu_custom_call.1} parent=5 // pred_check
      %p1414 = pneg %p1413
    $region66: #{tpu_custom_call.1} parent=5 // pred_check_branch
      %1416 = sbr.rel (%p1414) target = $region68
    $region67: #{tpu_custom_call.1} parent=5 // pred_region
      %s1417 = ssub.s32 %s16, 2
      // Predicated region
      $region69: #{tpu_custom_call.1} parent=67 // pred_check
        %p1418 = pneg %p260
      $region70: #{tpu_custom_call.1} parent=67 // pred_check_branch
        %1420 = sbr.rel (%p1418) target = $region72
      $region71: #{tpu_custom_call.1} parent=67 // pred_region
        %p1421 = scmp.lt.s32.totalorder %s22, 1
        %s1422 = scalar_select %p1421, %s22, 1
        %s1423 = smul.addr %s1422, 4
        %s1424 = smul.addr %s1423, 8
        %s1425 = scalar_lea.vmem %s10, %s1424
      $region72: #{tpu_custom_call.1} parent=67 // pred_fallthru
        _
    $region68: #{tpu_custom_call.1} parent=5 // pred_fallthru
      _
  $region6: #{tpu_custom_call.1} parent=0 // loop_footer
    %s20 = sadd.s32 1, %s16
  $region7: #{tpu_custom_call.1} parent=0 // loop_footer_branch
    %15 = sbr.rel target = $region3
  $region8: #{tpu_custom_call.1} parent=0 // loop_exit
    _

</llo_original>
